<compile_context>
chip_gen: v5e
topology: v5e:2x2
jax: 0.10.0
libtpu: 0.0.40
codegen_flags: <defaults>
</compile_context>

<pallas_src>
import functools

import jax
import jax.numpy as jnp
from jax.experimental import pallas as pl
from jax.experimental.pallas import tpu as pltpu


def decoder_kernel(x_ref, kron_ref, c_ref, w1t_ref, b1_ref, w2t_ref, b2_ref,
                   recon_ref, h_ref):
    dot = functools.partial(jnp.dot,
                            preferred_element_type=jnp.float32,
                            precision=jax.lax.Precision.HIGHEST)

    # Adjacency stage: one lane-dense GEMM against the batch-invariant
    # block-diagonal I_{tile_b} (x) adj_inv^T, plus the precomputed Wa correction.
    hf = dot(x_ref[...], kron_ref[...]) + c_ref[...]          # (x_dim, L)
    h_ref[...] = hf.astype(h_ref.dtype)

    # MLP: fc2(relu(fc1(h))), feature-major so both GEMMs keep the lane-dense
    # (batch*node) axis as N and stores stay unmasked along lanes.
    z = dot(w1t_ref[...], hf) + b1_ref[...]                   # (hidden, L)
    z = jnp.maximum(z, 0.0)
    recon = dot(w2t_ref[...], z) + b2_ref[...]                # (x_dim, L)
    recon_ref[...] = recon.astype(recon_ref.dtype)


def _pick_tile_b(B, d, lane_cap=1024):
    """Pick a batch tile so L = tile_b*d (the lane width) is a multiple of 128
    (or the full extent), capped so the block-diagonal adjacency stays small in
    VMEM, preferring >=2 grid steps so v7x megacore sharding actually engages
    (negligible cost on single-TC v5e/v6e: at most one extra ~0.35us step)."""
    total = B * d
    cands = []
    for t in range(1, B + 1):
        if B % t:
            continue
        L = t * d
        if L % 128 == 0 or L == total:      # (8,128) lane rule: multiple or full
            cands.append(t)
    capped = [t for t in cands if t * d <= lane_cap]
    multi = [t for t in capped if B // t >= 2]
    if multi:
        return max(multi, key=lambda t: t * d)
    if capped:
        return max(capped, key=lambda t: t * d)
    # TODO(synk): ragged B*d with no 128-aligned divisor falls back to a single
    # whole-array block; pad the batch in the wrapper if this ever risks VMEM
    # OOM on v7x (64 MiB physical).
    return max(cands, key=lambda t: t * d) if cands else B


@functools.partial(jax.jit, static_argnames=("tile_b",))
def decoder_forward(x, adj_A_amplified, Wa, W1, b1, W2, b2, *, tile_b=None):
    """x: [B, d, x_dim]; W1: [x_dim, hidden] (= fc1.weight.T); W2: [hidden, x_dim]."""
    B, d, x_dim = x.shape
    hidden = W1.shape[1]
    f32 = jnp.float32

    # ---- batch-invariant prep, hoisted out of the kernel (tiny XLA ops) ----
    adj_inv = jnp.linalg.inv(
        jnp.eye(d, dtype=f32) - jnp.transpose(adj_A_amplified).astype(f32))
    wa = jnp.reshape(Wa, (-1,)).astype(f32)                               # (x_dim,)
    # h = adj_inv @ (x + Wa) - Wa  ==  adj_inv @ x + C
    c = (jnp.sum(adj_inv, axis=1, keepdims=True) - 1.0) * wa[None, :]     # (d, x_dim)

    if tile_b is None:
        tile_b = _pick_tile_b(B, d)
    assert B % tile_b == 0, "tile_b must divide B"
    n_tiles = B // tile_b
    L = tile_b * d

    # One GEMM per tile instead of tile_b micro-matmuls: block-diag adjacency.
    kron = jnp.kron(jnp.eye(tile_b, dtype=f32), adj_inv.T)                # (L, L)
    cF = jnp.tile(c.T, (1, tile_b))                                       # (x_dim, L)

    # Feature-major, lane-dense views: lanes index (batch, node), b-major.
    xF = jnp.transpose(x.astype(f32), (2, 0, 1)).reshape(x_dim, B * d)    # (x_dim, B*d)
    w1T = W1.astype(f32).T                                                # (hidden, x_dim)
    w2T = W2.astype(f32).T                                                # (x_dim, hidden)
    b1c = jnp.reshape(b1.astype(f32), (hidden, 1))
    b2c = jnp.reshape(b2.astype(f32), (x_dim, 1))

    # VMEM-aware limit: double-buffered kron + (x, h, recon, C) blocks + headroom,
    # capped at 48 MiB so it also fits v7x's 64 MiB physical VMEM.
    pad_rows = -(-max(x_dim, hidden) // 8) * 8
    est = 2 * (L * L * 4) + 8 * (pad_rows * L * 4) + (2 << 20)
    vmem_limit = int(min(48 << 20, max(16 << 20, 2 * est)))

    grid_spec = pltpu.PrefetchScalarGridSpec(
        num_scalar_prefetch=0,
        grid=(n_tiles,),
        in_specs=[
            pl.BlockSpec((x_dim, L), lambda i: (0, i)),        # xF tile
            pl.BlockSpec((L, L), lambda i: (0, 0)),            # block-diag adjacency (resident)
            pl.BlockSpec((x_dim, L), lambda i: (0, 0)),        # Wa correction (resident)
            pl.BlockSpec((hidden, x_dim), lambda i: (0, 0)),   # fc1 weight (W1^T)
            pl.BlockSpec((hidden, 1), lambda i: (0, 0)),       # fc1 bias (column)
            pl.BlockSpec((x_dim, hidden), lambda i: (0, 0)),   # fc2 weight (W2^T)
            pl.BlockSpec((x_dim, 1), lambda i: (0, 0)),        # fc2 bias (column)
        ],
        out_specs=[
            pl.BlockSpec((x_dim, L), lambda i: (0, i)),        # reconF
            pl.BlockSpec((x_dim, L), lambda i: (0, i)),        # hF
        ],
    )

    reconF, hF = pl.pallas_call(
        decoder_kernel,
        out_shape=(
            jax.ShapeDtypeStruct((x_dim, B * d), f32),
            jax.ShapeDtypeStruct((x_dim, B * d), f32),
        ),
        grid_spec=grid_spec,
        compiler_params=pltpu.CompilerParams(
            dimension_semantics=("parallel",),      # no cross-step state -> megacore-safe
            vmem_limit_bytes=vmem_limit),
    )(xF, kron, cF, w1T, b1c, w2T, b2c)

    # Back to the module's (B, d, x_dim) layout (XLA-side layout plumbing).
    recon = jnp.transpose(reconF.reshape(x_dim, B, d), (1, 2, 0))
    h = jnp.transpose(hF.reshape(x_dim, B, d), (1, 2, 0))
    return recon, h


def decoder_reference(x, adj_A_amplified, Wa, W1, b1, W2, b2):
    """Pure-JAX reference mirroring the PyTorch Decoder.forward."""
    d = adj_A_amplified.shape[0]
    adj_inv = jnp.linalg.inv(jnp.eye(d, dtype=jnp.float32) - adj_A_amplified.T)
    h = jnp.einsum("ij,bjk->bik", adj_inv, x + Wa) - Wa
    recon = jnp.maximum(h @ W1 + b1, 0.0) @ W2 + b2
    return recon, h


if __name__ == "__main__":
    jax.config.update("jax_default_matmul_precision", "highest")

    B, d, x_dim, hidden = 2, 8, 4, 32
    key = jax.random.PRNGKey(0)
    k_x, k_adj, k_wa, k_w1, k_b1, k_w2, k_b2 = jax.random.split(key, 7)

    # Parameter init mirroring the torch module shapes:
    #   fc1.weight: (hidden, x_dim) xavier_normal -> stored transposed (x_dim, hidden)
    #   fc2.weight: (x_dim, hidden) xavier_normal -> stored transposed (hidden, x_dim)
    std1 = (2.0 / (x_dim + hidden)) ** 0.5
    std2 = (2.0 / (hidden + x_dim)) ** 0.5
    W1 = std1 * jax.random.normal(k_w1, (x_dim, hidden), dtype=jnp.float32)
    b1 = (1.0 / (x_dim ** 0.5)) * (2.0 * jax.random.uniform(k_b1, (hidden,), dtype=jnp.float32) - 1.0)
    W2 = std2 * jax.random.normal(k_w2, (hidden, x_dim), dtype=jnp.float32)
    b2 = (1.0 / (hidden ** 0.5)) * (2.0 * jax.random.uniform(k_b2, (x_dim,), dtype=jnp.float32) - 1.0)

    adj_A_amplified = 0.1 * jax.random.normal(k_adj, (d, d), dtype=jnp.float32)
    Wa = 0.1 * jax.random.normal(k_wa, (x_dim,), dtype=jnp.float32)
    x = jax.random.normal(k_x, (B, d, x_dim), dtype=jnp.float32)

    recon, h = decoder_forward(x, adj_A_amplified, Wa, W1, b1, W2, b2)
    jax.block_until_ready((recon, h))

    ref_recon, ref_h = decoder_reference(x, adj_A_amplified, Wa, W1, b1, W2, b2)
    assert jnp.allclose(recon, ref_recon, rtol=1e-3, atol=1e-3)
    assert jnp.allclose(h, ref_h, rtol=1e-3, atol=1e-3)

    print("KERNEL_OK")
</pallas_src>

<mosaic_0001>
module attributes {stable_mosaic.version = 11 : i64} {
  func.func @decoder_kernel(%arg0: i32, %arg1: memref<4x16xf32, #tpu.memory_space<vmem>>, %arg2: memref<16x16xf32, #tpu.memory_space<vmem>>, %arg3: memref<4x16xf32, #tpu.memory_space<vmem>>, %arg4: memref<32x4xf32, #tpu.memory_space<vmem>>, %arg5: memref<32x1xf32, #tpu.memory_space<vmem>>, %arg6: memref<4x32xf32, #tpu.memory_space<vmem>>, %arg7: memref<4x1xf32, #tpu.memory_space<vmem>>, %arg8: memref<4x16xf32, #tpu.memory_space<vmem>>, %arg9: memref<4x16xf32, #tpu.memory_space<vmem>>) attributes {dimension_semantics = [#tpu.dimension_semantics<parallel>], iteration_bounds = array<i64: 1>, scalar_prefetch = 0 : i64, scratch_operands = 0 : i64, tpu.core_type = #tpu.core_type<tc>, window_params = [{transform_indices = @transform_0, window_bounds = array<i64: 4, 16>}, {pipeline_mode = #tpu.pipeline_mode<synchronous>, transform_indices = @transform_1, window_bounds = array<i64: 16, 16>}, {pipeline_mode = #tpu.pipeline_mode<synchronous>, transform_indices = @transform_2, window_bounds = array<i64: 4, 16>}, {pipeline_mode = #tpu.pipeline_mode<synchronous>, transform_indices = @transform_3, window_bounds = array<i64: 32, 4>}, {pipeline_mode = #tpu.pipeline_mode<synchronous>, transform_indices = @transform_4, window_bounds = array<i64: 32, 1>}, {pipeline_mode = #tpu.pipeline_mode<synchronous>, transform_indices = @transform_5, window_bounds = array<i64: 4, 32>}, {pipeline_mode = #tpu.pipeline_mode<synchronous>, transform_indices = @transform_6, window_bounds = array<i64: 4, 1>}, {transform_indices = @transform_7, window_bounds = array<i64: 4, 16>}, {transform_indices = @transform_8, window_bounds = array<i64: 4, 16>}]} {
    %c0 = arith.constant 0 : index
    %c0_0 = arith.constant 0 : index
    %0 = vector.load %arg1[%c0, %c0_0] : memref<4x16xf32, #tpu.memory_space<vmem>>, vector<4x16xf32>
    %c0_1 = arith.constant 0 : index
    %c0_2 = arith.constant 0 : index
    %1 = vector.load %arg2[%c0_1, %c0_2] : memref<16x16xf32, #tpu.memory_space<vmem>>, vector<16x16xf32>
    %cst = arith.constant dense<0.000000e+00> : vector<4x16xf32>
    %2 = tpu.matmul %0, %1, %cst {dimension_numbers = #tpu.dot_dimension_numbers<[1], [0], [0], [1], [0, 0, 1, 1], [], []>, precision = #tpu.contract_precision<fp32>} : vector<4x16xf32>, vector<16x16xf32>, vector<4x16xf32> -> vector<4x16xf32>
    %c0_3 = arith.constant 0 : index
    %c0_4 = arith.constant 0 : index
    %3 = vector.load %arg3[%c0_3, %c0_4] : memref<4x16xf32, #tpu.memory_space<vmem>>, vector<4x16xf32>
    %4 = arith.addf %2, %3 : vector<4x16xf32>
    %c0_5 = arith.constant 0 : index
    %c0_6 = arith.constant 0 : index
    %5 = vector.load %arg9[%c0_5, %c0_6] : memref<4x16xf32, #tpu.memory_space<vmem>>, vector<4x16xf32>
    tpu.vector_store %arg9[%c0_5, %c0_6], %4 {strides = array<i32>} : memref<4x16xf32, #tpu.memory_space<vmem>>, vector<4x16xf32>,
    %c0_7 = arith.constant 0 : index
    %c0_8 = arith.constant 0 : index
    %6 = vector.load %arg4[%c0_7, %c0_8] : memref<32x4xf32, #tpu.memory_space<vmem>>, vector<32x4xf32>
    %cst_9 = arith.constant dense<0.000000e+00> : vector<32x16xf32>
    %7 = tpu.matmul %6, %4, %cst_9 {dimension_numbers = #tpu.dot_dimension_numbers<[1], [0], [0], [1], [0, 0, 1, 1], [], []>, precision = #tpu.contract_precision<fp32>} : vector<32x4xf32>, vector<4x16xf32>, vector<32x16xf32> -> vector<32x16xf32>
    %c0_10 = arith.constant 0 : index
    %c0_11 = arith.constant 0 : index
    %8 = vector.load %arg5[%c0_10, %c0_11] : memref<32x1xf32, #tpu.memory_space<vmem>>, vector<32x1xf32>
    %9 = vector.broadcast %8 : vector<32x1xf32> to vector<32x16xf32>
    %10 = arith.addf %7, %9 : vector<32x16xf32>
    %cst_12 = arith.constant 0.000000e+00 : f32
    %11 = vector.broadcast %cst_12 : f32 to vector<32x16xf32>
    %12 = arith.maximumf %10, %11 : vector<32x16xf32>
    %c0_13 = arith.constant 0 : index
    %c0_14 = arith.constant 0 : index
    %13 = vector.load %arg6[%c0_13, %c0_14] : memref<4x32xf32, #tpu.memory_space<vmem>>, vector<4x32xf32>
    %cst_15 = arith.constant dense<0.000000e+00> : vector<4x16xf32>
    %14 = tpu.matmul %13, %12, %cst_15 {dimension_numbers = #tpu.dot_dimension_numbers<[1], [0], [0], [1], [0, 0, 1, 1], [], []>, precision = #tpu.contract_precision<fp32>} : vector<4x32xf32>, vector<32x16xf32>, vector<4x16xf32> -> vector<4x16xf32>
    %c0_16 = arith.constant 0 : index
    %c0_17 = arith.constant 0 : index
    %15 = vector.load %arg7[%c0_16, %c0_17] : memref<4x1xf32, #tpu.memory_space<vmem>>, vector<4x1xf32>
    %16 = vector.broadcast %15 : vector<4x1xf32> to vector<4x16xf32>
    %17 = arith.addf %14, %16 : vector<4x16xf32>
    %c0_18 = arith.constant 0 : index
    %c0_19 = arith.constant 0 : index
    %18 = vector.load %arg8[%c0_18, %c0_19] : memref<4x16xf32, #tpu.memory_space<vmem>>, vector<4x16xf32>
    tpu.vector_store %arg8[%c0_18, %c0_19], %17 {strides = array<i32>} : memref<4x16xf32, #tpu.memory_space<vmem>>, vector<4x16xf32>,
    return
  }
  func.func @transform_0(%arg0: i32) -> (i32, i32) {
    %c0_i32 = arith.constant 0 : i32
    %c0_i32_0 = arith.constant 0 : i32
    return %c0_i32, %arg0 : i32, i32
  }
  func.func @transform_1(%arg0: i32) -> (i32, i32) {
    %c0_i32 = arith.constant 0 : i32
    %c0_i32_0 = arith.constant 0 : i32
    %c0_i32_1 = arith.constant 0 : i32
    return %c0_i32, %c0_i32_0 : i32, i32
  }
  func.func @transform_2(%arg0: i32) -> (i32, i32) {
    %c0_i32 = arith.constant 0 : i32
    %c0_i32_0 = arith.constant 0 : i32
    %c0_i32_1 = arith.constant 0 : i32
    return %c0_i32, %c0_i32_0 : i32, i32
  }
  func.func @transform_3(%arg0: i32) -> (i32, i32) {
    %c0_i32 = arith.constant 0 : i32
    %c0_i32_0 = arith.constant 0 : i32
    %c0_i32_1 = arith.constant 0 : i32
    return %c0_i32, %c0_i32_0 : i32, i32
  }
  func.func @transform_4(%arg0: i32) -> (i32, i32) {
    %c0_i32 = arith.constant 0 : i32
    %c0_i32_0 = arith.constant 0 : i32
    %c0_i32_1 = arith.constant 0 : i32
    return %c0_i32, %c0_i32_0 : i32, i32
  }
  func.func @transform_5(%arg0: i32) -> (i32, i32) {
    %c0_i32 = arith.constant 0 : i32
    %c0_i32_0 = arith.constant 0 : i32
    %c0_i32_1 = arith.constant 0 : i32
    return %c0_i32, %c0_i32_0 : i32, i32
  }
  func.func @transform_6(%arg0: i32) -> (i32, i32) {
    %c0_i32 = arith.constant 0 : i32
    %c0_i32_0 = arith.constant 0 : i32
    %c0_i32_1 = arith.constant 0 : i32
    return %c0_i32, %c0_i32_0 : i32, i32
  }
  func.func @transform_7(%arg0: i32) -> (i32, i32) {
    %c0_i32 = arith.constant 0 : i32
    %c0_i32_0 = arith.constant 0 : i32
    return %c0_i32, %arg0 : i32, i32
  }
  func.func @transform_8(%arg0: i32) -> (i32, i32) {
    %c0_i32 = arith.constant 0 : i32
    %c0_i32_0 = arith.constant 0 : i32
    return %c0_i32, %arg0 : i32, i32
  }
}

</mosaic_0001>

<llo_original>
// kernel: custom-call.11
$region0: #{custom-call.11}
  %s0 = inlined_call_operand.vmem [shape: f32[8,8], index: 0, kind: input, shape index: {}]
  %s1 = inlined_call_operand.vmem [shape: f32[8,8], index: 1, kind: output, shape index: {0}]
  %s2 = inlined_call_operand.hbm [shape: s32[8], index: 2, kind: output, shape index: {1}]
  %s3 = inlined_call_operand.vmem [shape: s32[8], index: 3, kind: output, shape index: {2}]
  %4 = xla_tuple %s1, %s2, %s3
  $region1: #{custom-call.11} parent=0
    #allocation0 [shape = 'u8[4096]{0}', space=vmem, size = 0x1000, scoped, tag = 'operand span for operand 0']
    #allocation1 [shape = 'u8[4096]{0}', space=vmem, size = 0x1000, scoped, tag = 'operand span for operand 1']
    #allocation2 [shape = 'u8[4096]{0}', space=vmem, size = 0x1000, scoped, tag = 'operand span for operand 2']
    #allocation3 [shape = 'u8[512]{0}', space=vmem, size = 0x400, scoped, tag = 'packed  for operand 2']
    #allocation4 [shape = 's32[1]{0}', space=sflag, size = 0x4, scoped, tag = 'scoped memory for custom-call.11']
    #allocation5 [shape = 'u8[4096]{0}', space=vmem, size = 0x1000, scoped, tag = 'operand span for operand 3']
    #allocation6 [shape = 'u8[512]{0}', space=vmem, size = 0x400, scoped, tag = 'packed  for operand 3']
    #allocation7 [shape = 's32[8,128]{1,0}', space=vmem, size = 0x1000, scoped, tag = 'scratch for permutations']
    %5 = vsyncpa [#allocation4], 0
    // Predicated region
    $region2: #{custom-call.11} parent=1 // pred_check
      _
    $region3: #{custom-call.11} parent=1 // pred_check_branch
      %7 = sbr.rel (0) target = $region5
    $region4: #{custom-call.11} parent=1 // pred_region
      %p9 = scmp.gt.s32.totalorder 1, 0
      // Predicated region
      $region6: #{custom-call.11} parent=4 // pred_check
        %p10 = pneg %p9
      $region7: #{custom-call.11} parent=4 // pred_check_branch
        %12 = sbr.rel (%p10) target = $region9
      $region8: #{custom-call.11} parent=4 // pred_region
        %s13 = ssub.s32 1, 1
        %s14 = smul.u32 %s13, 8
        %s15 = scalar_lea.vmem %s0, %s14
        %v16 = vld [vmem:[%s0] sm:$0xff]
        // While loop
        $region10: #{custom-call.11} parent=8 // loop_pre_header
          _
        $region11: #{custom-call.11} parent=8 // loop_header
          %s17 = sphi %s0, %s39
          %s18 = sphi [#allocation0], %s40
          %v19 = vphi %v16, %v41
          %s20 = ssub.s32 %s15, 64
          %p21 = scmp.gt.s32.totalorder %s17, %s20
        $region12: #{custom-call.11} parent=8 // loop_header_branch
          %23 = sbr.rel (%p21) target = $region16
        $region13: #{custom-call.11} parent=8 // loop_body
          %24 = vst [vmem:[%s18] sm:$0xff] %v19
          %v25 = vld [vmem:[%s17 + $0x8] sm:$0xff]
          %26 = vst [vmem:[%s18 + $0x8] sm:$0xff] %v25
          %v27 = vld [vmem:[%s17 + $0x10] sm:$0xff]
          %28 = vst [vmem:[%s18 + $0x10] sm:$0xff] %v27
          %v29 = vld [vmem:[%s17 + $0x18] sm:$0xff]
          %30 = vst [vmem:[%s18 + $0x18] sm:$0xff] %v29
          %v31 = vld [vmem:[%s17 + $0x20] sm:$0xff]
          %32 = vst [vmem:[%s18 + $0x20] sm:$0xff] %v31
          %v33 = vld [vmem:[%s17 + $0x28] sm:$0xff]
          %34 = vst [vmem:[%s18 + $0x28] sm:$0xff] %v33
          %v35 = vld [vmem:[%s17 + $0x30] sm:$0xff]
          %36 = vst [vmem:[%s18 + $0x30] sm:$0xff] %v35
          %v37 = vld [vmem:[%s17 + $0x38] sm:$0xff]
          %38 = vst [vmem:[%s18 + $0x38] sm:$0xff] %v37
        $region14: #{custom-call.11} parent=8 // loop_footer
          %s39 = scalar_lea.vmem %s17, 64
          %s40 = scalar_lea.vmem %s18, 64
          %v41 = vld [vmem:[%s17 + $0x40] sm:$0xff]
        $region15: #{custom-call.11} parent=8 // loop_footer_branch
          %42 = sbr.rel target = $region11
        $region16: #{custom-call.11} parent=8 // loop_exit
          _
        // While loop
        $region17: #{custom-call.11} parent=8 // loop_pre_header
          _
        $region18: #{custom-call.11} parent=8 // loop_header
          %s43 = sphi %s17, %s51
          %s44 = sphi %s18, %s52
          %v45 = vphi %v19, %v45
          %p46 = scmp.gt.s32.totalorder %s43, %s15
        $region19: #{custom-call.11} parent=8 // loop_header_branch
          %48 = sbr.rel (%p46) target = $region23
        $region20: #{custom-call.11} parent=8 // loop_body
          %v49 = vld [vmem:[%s43] sm:$0xff]
          %50 = vst [vmem:[%s44] sm:$0xff] %v49
        $region21: #{custom-call.11} parent=8 // loop_footer
          %s51 = scalar_lea.vmem %s43, 8
          %s52 = scalar_lea.vmem %s44, 8
        $region22: #{custom-call.11} parent=8 // loop_footer_branch
          %53 = sbr.rel target = $region18
        $region23: #{custom-call.11} parent=8 // loop_exit
          _
      $region9: #{custom-call.11} parent=4 // pred_fallthru
        _
      %s55 = ssub.s32 1, 1
      %s56 = smul.u32 1, 8
      %s57 = scalar_lea.vmem [#allocation0], %s56
      %s58 = smul.u32 1, 8
      %s59 = scalar_lea.vmem %s0, %s58
      %v60 = vld [vmem:[%s59] sm:%s55]
      %61 = vst [vmem:[%s57] sm:%s55] %v60
    $region5: #{custom-call.11} parent=1 // pred_fallthru
      _
    %v62 = vld [vmem:[#allocation0] sm:$0xff]
    %63 = vst [vmem:[#allocation1] sm:$0xff] %v62
    %64 = vst [vmem:[#allocation2] sm:$0x1] 0
    %v65 = vlaneseq
    %v66 = vshrl.u32 %v65, 7
    %v67 = vmov %v66
    %69 = vst [vmem:[#allocation7] sm:$0xff] %v67
    loop: start=0, step=1, limit=8
    $region25: #{custom-call.11} parent=1 // loop_pre_header
      _
    $region26: #{custom-call.11} parent=1 // loop_header
      %s71 = sphi 0, %s75
      %p72 = scmp.ge.s32.totalorder %s71, 8
    $region27: #{custom-call.11} parent=1 // loop_header_branch
      %74 = sbr.rel (%p72) target = $region31
    $region28: #{custom-call.11} parent=1 // loop_body
      %v76 = vstv %s71
      %v77 = vlaneseq
      %v78 = vshrl.u32 %v77, 7
      %v79 = vmov %v78
      %v80 = vld [vmem:[#allocation1] sm:$0xff]
      %v81 = vand.u32 2147483647, %v80
      %v83 = vstv %s71
      %vm84 = vcmp.ge.s32.totalorder %v79, %v83
      %vm85 = vcmp.lt.s32.totalorder %v79, 8
      %vm86 = vmand %vm84, %vm85
      %vm87 = vcmp.lt.f32.partialorder -inf, %v81
      %vm88 = vmand %vm86, %vm87
      %v89 = vsel %vm88, %v79, %v76
      %v90 = vsel %vm88, %v81, -inf
      %v91 = vrot.slane %v90, 1
      %v92 = vrot.slane %v89, 1
      %vm93 = vcmp.ge.f32.partialorder %v91, %v90
      %v94 = vsel %vm93, %v91, %v90
      %v95 = vsel %vm93, %v92, %v89
      %v96 = vrot.slane %v91, 1
      %v97 = vrot.slane %v92, 1
      %vm98 = vcmp.ge.f32.partialorder %v96, %v94
      %v99 = vsel %vm98, %v96, %v94
      %v100 = vsel %vm98, %v97, %v95
      %v101 = vrot.slane %v96, 1
      %v102 = vrot.slane %v97, 1
      %vm103 = vcmp.ge.f32.partialorder %v101, %v99
      %v104 = vsel %vm103, %v101, %v99
      %v105 = vsel %vm103, %v102, %v100
      %v106 = vrot.slane %v101, 1
      %v107 = vrot.slane %v102, 1
      %vm108 = vcmp.ge.f32.partialorder %v106, %v104
      %v109 = vsel %vm108, %v106, %v104
      %v110 = vsel %vm108, %v107, %v105
      %v111 = vrot.slane %v106, 1
      %v112 = vrot.slane %v107, 1
      %vm113 = vcmp.ge.f32.partialorder %v111, %v109
      %v114 = vsel %vm113, %v111, %v109
      %v115 = vsel %vm113, %v112, %v110
      %v116 = vrot.slane %v111, 1
      %v117 = vrot.slane %v112, 1
      %vm118 = vcmp.ge.f32.partialorder %v116, %v114
      %v119 = vsel %vm118, %v116, %v114
      %v120 = vsel %vm118, %v117, %v115
      %v121 = vrot.slane %v116, 1
      %v122 = vrot.slane %v117, 1
      %vm123 = vcmp.ge.f32.partialorder %v121, %v119
      %v124 = vsel %vm123, %v121, %v119
      %v125 = vsel %vm123, %v122, %v120
      %s126 = ssub.s32 128, %s71
      %127 = vrot.lane.b32.xlu0 %v125, %s126
      %v128 = vpop.permute.xlu0 %127
      %s129 = vtos %v128
      %v130 = vstv %s71
      %v131 = vlaneseq
      %v132 = vand.u32 %v131, 127
      %vm133 = vcmp.eq.s32.totalorder %v132, %v130
      %v134 = vstv %s129
      %v135 = vld [vmem:[#allocation2] ss:$0 sm:$0xff]
      %v136 = vsel %vm133, %v134, %v135
      %137 = vst [vmem:[#allocation2] sm:$0x1] %v136
      %s138 = scalar_lea.vmem [#allocation1], %s71
      %s139 = scalar_lea.vmem [#allocation1], %s129
      %v140 = vld [vmem:[%s138] ss:$0 sm:$0xff]
      %v141 = vld [vmem:[%s139] ss:$0 sm:$0xff]
      %142 = vst [vmem:[%s139] sm:$0x1] %v140
      %143 = vst [vmem:[%s138] sm:$0x1] %v141
      %s144 = scalar_lea.vmem [#allocation7], %s71
      %s145 = scalar_lea.vmem [#allocation7], %s129
      %v146 = vld [vmem:[%s144] ss:$0 sm:$0xff]
      %v147 = vld [vmem:[%s145] ss:$0 sm:$0xff]
      %148 = vst [vmem:[%s145] sm:$0x1] %v146
      %149 = vst [vmem:[%s144] sm:$0x1] %v147
      %vm150 = vcmp.ne.f32.partialorder %v141, 0.0
      %vm151 = vmand %vm133, %vm150
      %v152 = vsel %vm151, %v141, 1.0
      %v153 = vlaneseq
      %v154 = vand.u32 %v153, 127
      %v155 = vstv %s71
      %vm156 = vcmp.gt.s32.totalorder %v154, %v155
      %v157 = vsel %vm156, %v141, 0.0
      %v158 = vlaneseq
      %v159 = vshrl.u32 %v158, 7
      %v160 = vmov %v159
      %v161 = vld [vmem:[#allocation1] sm:$0xff]
      %v163 = vstv %s71
      %vm164 = vcmp.gt.s32.totalorder %v160, %v163
      %v165 = vsel %vm164, %v152, 1.0
      %v166 = vrcp.pop %v165
      %v167 = vmul.f32 %v165, %v166
      %v168 = vsub.f32 1.0, %v167
      %v169 = vmul.f32 %v166, %v168
      %v170 = vadd.f32 %v166, %v169
      %vm171 = vweird.f32 %v165
      %vm172 = vweird.f32 %v166
      %vm173 = vmor %vm171, %vm172
      %v174 = vsel %vm173, %v166, %v170
      %v175 = vand.u32 2147483647, %v165
      %vm176 = vcmp.eq.f32.partialorder %v175, 8.507059e+37
      %v177 = vand.u32 %v165, 2147483648
      %v178 = vor.u32 1.1754944e-38, %v177
      %v179 = vsel %vm176, %v178, %v174
      %v180 = vmul.f32 %v161, %v179
      %vm181 = vmand %vm164, %vm133
      %v182 = vsel %vm181, %v180, 0.0
      %183 = vadd.xlane.f32.xlu0 %v182
      %v184 = vpop.xlane.xlu0 %183
      %v185 = vmul.f32 %v184, %v157
      %v186 = vsub.f32 %v180, %v185
      %187 = vst [vmem:[#allocation1] sm:$0xff] %v186
    $region29: #{custom-call.11} parent=1 // loop_footer
      %s75 = sadd.s32 1, %s71
    $region30: #{custom-call.11} parent=1 // loop_footer_branch
      %70 = sbr.rel target = $region26
    $region31: #{custom-call.11} parent=1 // loop_exit
      _
    %v188 = vld [vmem:[#allocation7] sm:$0xff]
    %s189 = scalar_lea.vmem [#allocation7], 8
    %s190 = scalar_lea.vmem [#allocation7], 16
    %s191 = scalar_lea.vmem [#allocation7], 24
    %s192 = scalar_lea.vmem [#allocation7], 32
    %s193 = scalar_lea.vmem [#allocation7], 40
    %s194 = scalar_lea.vmem [#allocation7], 48
    %s195 = scalar_lea.vmem [#allocation7], 56
    %s196 = scalar_lea.vmem [#allocation7], 64
    %s197 = scalar_lea.vmem [#allocation7], 72
    %s198 = scalar_lea.vmem [#allocation7], 80
    %s199 = scalar_lea.vmem [#allocation7], 88
    %s200 = scalar_lea.vmem [#allocation7], 96
    %s201 = scalar_lea.vmem [#allocation7], 104
    %s202 = scalar_lea.vmem [#allocation7], 112
    %s203 = scalar_lea.vmem [#allocation7], 120
    %204 = vxpose.xlu0.b32.start [1/16] %v188, 128
    %205 = vxpose.xlu0.b32.cont [2/16] 0, 128
    %206 = vxpose.xlu0.b32.cont [3/16] 0, 128
    %207 = vxpose.xlu0.b32.cont [4/16] 0, 128
    %208 = vxpose.xlu0.b32.cont [5/16] 0, 128
    %209 = vxpose.xlu0.b32.cont [6/16] 0, 128
    %210 = vxpose.xlu0.b32.cont [7/16] 0, 128
    %211 = vxpose.xlu0.b32.cont [8/16] 0, 128
    %212 = vxpose.xlu0.b32.cont [9/16] 0, 128
    %213 = vxpose.xlu0.b32.cont [10/16] 0, 128
    %214 = vxpose.xlu0.b32.cont [11/16] 0, 128
    %215 = vxpose.xlu0.b32.cont [12/16] 0, 128
    %216 = vxpose.xlu0.b32.cont [13/16] 0, 128
    %217 = vxpose.xlu0.b32.cont [14/16] 0, 128
    %218 = vxpose.xlu0.b32.cont [15/16] 0, 128
    %219 = vxpose.xlu0.b32.end [16/16] 0, 128
    %v220 = vpop.trf.xlu0
    %v221 = vpop.trf.xlu0
    %v222 = vpop.trf.xlu0
    %v223 = vpop.trf.xlu0
    %v224 = vpop.trf.xlu0
    %v225 = vpop.trf.xlu0
    %v226 = vpop.trf.xlu0
    %v227 = vpop.trf.xlu0
    %v228 = vpop.trf.xlu0
    %v229 = vpop.trf.xlu0
    %v230 = vpop.trf.xlu0
    %v231 = vpop.trf.xlu0
    %v232 = vpop.trf.xlu0
    %v233 = vpop.trf.xlu0
    %v234 = vpop.trf.xlu0
    %v235 = vpop.trf.xlu0
    %236 = vst [vmem:[#allocation5] sm:$0x1] %v220
    %s238 = ssub.s32 2, 1
    %v239 = vld [vmem:[#allocation2] sm:%s238]
    %s241 = ssub.s32 2, 1
    %242 = vst [vmem:[#allocation3] sm:%s241] %v239
    %s244 = ssub.s32 2, 1
    %v245 = vld [vmem:[#allocation5] sm:%s244]
    %s247 = ssub.s32 2, 1
    %248 = vst [vmem:[#allocation6] sm:%s247] %v245
    // Predicated region
    $region32: #{custom-call.11} parent=1 // pred_check
      _
    $region33: #{custom-call.11} parent=1 // pred_check_branch
      %250 = sbr.rel (0) target = $region35
    $region34: #{custom-call.11} parent=1 // pred_region
      %p252 = scmp.gt.s32.totalorder 1, 0
      // Predicated region
      $region36: #{custom-call.11} parent=34 // pred_check
        %p253 = pneg %p252
      $region37: #{custom-call.11} parent=34 // pred_check_branch
        %255 = sbr.rel (%p253) target = $region39
      $region38: #{custom-call.11} parent=34 // pred_region
        %s256 = ssub.s32 1, 1
        %s257 = smul.u32 %s256, 8
        %s258 = scalar_lea.vmem [#allocation1], %s257
        %v259 = vld [vmem:[#allocation1] sm:$0xff]
        // While loop
        $region40: #{custom-call.11} parent=38 // loop_pre_header
          _
        $region41: #{custom-call.11} parent=38 // loop_header
          %s260 = sphi [#allocation1], %s282
          %s261 = sphi %s1, %s283
          %v262 = vphi %v259, %v284
          %s263 = ssub.s32 %s258, 64
          %p264 = scmp.gt.s32.totalorder %s260, %s263
        $region42: #{custom-call.11} parent=38 // loop_header_branch
          %266 = sbr.rel (%p264) target = $region46
        $region43: #{custom-call.11} parent=38 // loop_body
          %267 = vst [vmem:[%s261] sm:$0xff] %v262
          %v268 = vld [vmem:[%s260 + $0x8] sm:$0xff]
          %269 = vst [vmem:[%s261 + $0x8] sm:$0xff] %v268
          %v270 = vld [vmem:[%s260 + $0x10] sm:$0xff]
          %271 = vst [vmem:[%s261 + $0x10] sm:$0xff] %v270
          %v272 = vld [vmem:[%s260 + $0x18] sm:$0xff]
          %273 = vst [vmem:[%s261 + $0x18] sm:$0xff] %v272
          %v274 = vld [vmem:[%s260 + $0x20] sm:$0xff]
          %275 = vst [vmem:[%s261 + $0x20] sm:$0xff] %v274
          %v276 = vld [vmem:[%s260 + $0x28] sm:$0xff]
          %277 = vst [vmem:[%s261 + $0x28] sm:$0xff] %v276
          %v278 = vld [vmem:[%s260 + $0x30] sm:$0xff]
          %279 = vst [vmem:[%s261 + $0x30] sm:$0xff] %v278
          %v280 = vld [vmem:[%s260 + $0x38] sm:$0xff]
          %281 = vst [vmem:[%s261 + $0x38] sm:$0xff] %v280
        $region44: #{custom-call.11} parent=38 // loop_footer
          %s282 = scalar_lea.vmem %s260, 64
          %s283 = scalar_lea.vmem %s261, 64
          %v284 = vld [vmem:[%s260 + $0x40] sm:$0xff]
        $region45: #{custom-call.11} parent=38 // loop_footer_branch
          %285 = sbr.rel target = $region41
        $region46: #{custom-call.11} parent=38 // loop_exit
          _
        // While loop
        $region47: #{custom-call.11} parent=38 // loop_pre_header
          _
        $region48: #{custom-call.11} parent=38 // loop_header
          %s286 = sphi %s260, %s294
          %s287 = sphi %s261, %s295
          %v288 = vphi %v262, %v288
          %p289 = scmp.gt.s32.totalorder %s286, %s258
        $region49: #{custom-call.11} parent=38 // loop_header_branch
          %291 = sbr.rel (%p289) target = $region53
        $region50: #{custom-call.11} parent=38 // loop_body
          %v292 = vld [vmem:[%s286] sm:$0xff]
          %293 = vst [vmem:[%s287] sm:$0xff] %v292
        $region51: #{custom-call.11} parent=38 // loop_footer
          %s294 = scalar_lea.vmem %s286, 8
          %s295 = scalar_lea.vmem %s287, 8
        $region52: #{custom-call.11} parent=38 // loop_footer_branch
          %296 = sbr.rel target = $region48
        $region53: #{custom-call.11} parent=38 // loop_exit
          _
      $region39: #{custom-call.11} parent=34 // pred_fallthru
        _
      %s298 = ssub.s32 1, 1
      %s299 = smul.u32 1, 8
      %s300 = scalar_lea.vmem %s1, %s299
      %s301 = smul.u32 1, 8
      %s302 = scalar_lea.vmem [#allocation1], %s301
      %v303 = vld [vmem:[%s302] sm:%s298]
      %304 = vst [vmem:[%s300] sm:%s298] %v303
    $region35: #{custom-call.11} parent=1 // pred_fallthru
      _
    // Predicated region
    $region54: #{custom-call.11} parent=1 // pred_check
      _
    $region55: #{custom-call.11} parent=1 // pred_check_branch
      %306 = sbr.rel (0) target = $region57
    $region56: #{custom-call.11} parent=1 // pred_region
      %308 = vsyncadd [#allocation4], 0
      %s310 = sshll.u32 [#allocation3], 4
      %s311 = int_to_ptr.vmem [resolvable:$true] %s310
      %s312 = sshll.u32 %s2, 4
      %s313 = int_to_ptr.hbm [resolvable:$true] %s312
      %315 = dma.vmem_to_hbm [thread:$0]  %s311, 16, %s313, [#allocation4]
    $region57: #{custom-call.11} parent=1 // pred_fallthru
      _
    // Predicated region
    $region58: #{custom-call.11} parent=1 // pred_check
      _
    $region59: #{custom-call.11} parent=1 // pred_check_branch
      %317 = sbr.rel (0) target = $region61
    $region60: #{custom-call.11} parent=1 // pred_region
      // Predicated region
      $region62: #{custom-call.11} parent=60 // pred_check
        _
      $region63: #{custom-call.11} parent=60 // pred_check_branch
        %319 = sbr.rel (0) target = $region65
      $region64: #{custom-call.11} parent=60 // pred_region
        %p321 = scmp.gt.s32.totalorder 0, 0
        // Predicated region
        $region66: #{custom-call.11} parent=64 // pred_check
          %p322 = pneg %p321
        $region67: #{custom-call.11} parent=64 // pred_check_branch
          %324 = sbr.rel (%p322) target = $region69
        $region68: #{custom-call.11} parent=64 // pred_region
          %s325 = ssub.s32 0, 1
          %s326 = smul.u32 %s325, 8
          %s327 = scalar_lea.vmem [#allocation6], %s326
          %v328 = vld [vmem:[#allocation6] sm:$0xff]
          // While loop
          $region70: #{custom-call.11} parent=68 // loop_pre_header
            _
          $region71: #{custom-call.11} parent=68 // loop_header
            %s329 = sphi [#allocation6], %s351
            %s330 = sphi %s3, %s352
            %v331 = vphi %v328, %v353
            %s332 = ssub.s32 %s327, 64
            %p333 = scmp.gt.s32.totalorder %s329, %s332
          $region72: #{custom-call.11} parent=68 // loop_header_branch
            %335 = sbr.rel (%p333) target = $region76
          $region73: #{custom-call.11} parent=68 // loop_body
            %336 = vst [vmem:[%s330] sm:$0xff] %v331
            %v337 = vld [vmem:[%s329 + $0x8] sm:$0xff]
            %338 = vst [vmem:[%s330 + $0x8] sm:$0xff] %v337
            %v339 = vld [vmem:[%s329 + $0x10] sm:$0xff]
            %340 = vst [vmem:[%s330 + $0x10] sm:$0xff] %v339
            %v341 = vld [vmem:[%s329 + $0x18] sm:$0xff]
            %342 = vst [vmem:[%s330 + $0x18] sm:$0xff] %v341
            %v343 = vld [vmem:[%s329 + $0x20] sm:$0xff]
            %344 = vst [vmem:[%s330 + $0x20] sm:$0xff] %v343
            %v345 = vld [vmem:[%s329 + $0x28] sm:$0xff]
            %346 = vst [vmem:[%s330 + $0x28] sm:$0xff] %v345
            %v347 = vld [vmem:[%s329 + $0x30] sm:$0xff]
            %348 = vst [vmem:[%s330 + $0x30] sm:$0xff] %v347
            %v349 = vld [vmem:[%s329 + $0x38] sm:$0xff]
            %350 = vst [vmem:[%s330 + $0x38] sm:$0xff] %v349
          $region74: #{custom-call.11} parent=68 // loop_footer
            %s351 = scalar_lea.vmem %s329, 64
            %s352 = scalar_lea.vmem %s330, 64
            %v353 = vld [vmem:[%s329 + $0x40] sm:$0xff]
          $region75: #{custom-call.11} parent=68 // loop_footer_branch
            %354 = sbr.rel target = $region71
          $region76: #{custom-call.11} parent=68 // loop_exit
            _
          // While loop
          $region77: #{custom-call.11} parent=68 // loop_pre_header
            _
          $region78: #{custom-call.11} parent=68 // loop_header
            %s355 = sphi %s329, %s363
            %s356 = sphi %s330, %s364
            %v357 = vphi %v331, %v357
            %p358 = scmp.gt.s32.totalorder %s355, %s327
          $region79: #{custom-call.11} parent=68 // loop_header_branch
            %360 = sbr.rel (%p358) target = $region83
          $region80: #{custom-call.11} parent=68 // loop_body
            %v361 = vld [vmem:[%s355] sm:$0xff]
            %362 = vst [vmem:[%s356] sm:$0xff] %v361
          $region81: #{custom-call.11} parent=68 // loop_footer
            %s363 = scalar_lea.vmem %s355, 8
            %s364 = scalar_lea.vmem %s356, 8
          $region82: #{custom-call.11} parent=68 // loop_footer_branch
            %365 = sbr.rel target = $region78
          $region83: #{custom-call.11} parent=68 // loop_exit
            _
        $region69: #{custom-call.11} parent=64 // pred_fallthru
          _
        %s367 = ssub.s32 2, 1
        %s368 = smul.u32 0, 8
        %s369 = scalar_lea.vmem %s3, %s368
        %s370 = smul.u32 0, 8
        %s371 = scalar_lea.vmem [#allocation6], %s370
        %v372 = vld [vmem:[%s371] sm:%s367]
        %373 = vst [vmem:[%s369] sm:%s367] %v372
      $region65: #{custom-call.11} parent=60 // pred_fallthru
        _
    $region61: #{custom-call.11} parent=1 // pred_fallthru
      _
    // Predicated region
    $region84: #{custom-call.11} parent=1 // pred_check
      _
    $region85: #{custom-call.11} parent=1 // pred_check_branch
      %375 = sbr.rel (0) target = $region87
    $region86: #{custom-call.11} parent=1 // pred_region
      %377 = dma.done [#allocation4], 16
    $region87: #{custom-call.11} parent=1 // pred_fallthru
      _
    // Predicated region
    $region88: #{custom-call.11} parent=1 // pred_check
      _
    $region89: #{custom-call.11} parent=1 // pred_check_branch
      %379 = sbr.rel (0) target = $region91
    $region90: #{custom-call.11} parent=1 // pred_region
      _
    $region91: #{custom-call.11} parent=1 // pred_fallthru
      _
    %380 = vsyncpa [#allocation4], 1

// kernel: custom-call.12
$region0: #{custom-call.12}
  %s0 = inlined_call_operand.vmem [shape: f32[1,8,8], index: 0, kind: input, shape index: {}]
  %s1 = inlined_call_operand.vmem [shape: f32[1,8,8], index: 1, kind: output, shape index: {}]
  $region1: #{custom-call.12} parent=0
    #allocation0 [shape = 'u8[4096]{0}', space=vmem, size = 0x1000, scoped, tag = 'operand span for operand 0']
    #allocation1 [shape = 'u8[4096]{0}', space=vmem, size = 0x1000, scoped, tag = 'operand span for operand 1']
    #allocation2 [shape = 'f32[8,8]{1,0}', space=vmem, size = 0x1000, scoped, tag = 'rescaled input a']
    // Predicated region
    $region2: #{custom-call.12} parent=1 // pred_check
      _
    $region3: #{custom-call.12} parent=1 // pred_check_branch
      %3 = sbr.rel (0) target = $region5
    $region4: #{custom-call.12} parent=1 // pred_region
      // Predicated region
      $region6: #{custom-call.12} parent=4 // pred_check
        _
      $region7: #{custom-call.12} parent=4 // pred_check_branch
        %5 = sbr.rel (0) target = $region9
      $region8: #{custom-call.12} parent=4 // pred_region
        // Predicated region
        $region21: #{custom-call.12} parent=8 // pred_check
          _
        $region22: #{custom-call.12} parent=8 // pred_check_branch
          %21 = sbr.rel (0) target = $region24
        $region23: #{custom-call.12} parent=8 // pred_region
          loop: start=0, step=1, limit=1
          $region25: #{custom-call.12} parent=23 // loop_pre_header
            _
          $region26: #{custom-call.12} parent=23 // loop_header
            %s23 = sphi 0, %s27
            %p24 = scmp.ge.s32.totalorder %s23, 1
            %s28 = sphi %s0, %s0
            %s29 = sphi [#allocation0], [#allocation0]
          $region27: #{custom-call.12} parent=23 // loop_header_branch
            %26 = sbr.rel (%p24) target = $region31
          $region28: #{custom-call.12} parent=23 // loop_body
            %v30 = vld [vmem:[%s28] sm:$0xff]
            %31 = vst [vmem:[%s29] sm:$0xff] %v30
          $region29: #{custom-call.12} parent=23 // loop_footer
            %s27 = sadd.s32 1, %s23
          $region30: #{custom-call.12} parent=23 // loop_footer_branch
            %22 = sbr.rel target = $region26
          $region31: #{custom-call.12} parent=23 // loop_exit
            _
        $region24: #{custom-call.12} parent=8 // pred_fallthru
          _
        // Predicated region
        $region32: #{custom-call.12} parent=8 // pred_check
          _
        $region33: #{custom-call.12} parent=8 // pred_check_branch
          %33 = sbr.rel target = $region35
        $region34: #{custom-call.12} parent=8 // pred_region
          _
        $region35: #{custom-call.12} parent=8 // pred_fallthru
          _
      $region9: #{custom-call.12} parent=4 // pred_fallthru
        _
      // Predicated region
      $region10: #{custom-call.12} parent=4 // pred_check
        _
      $region11: #{custom-call.12} parent=4 // pred_check_branch
        %7 = sbr.rel target = $region13
      $region12: #{custom-call.12} parent=4 // pred_region
        %s9 = ssub.s32 256, 1
        loop: start=0, step=1, limit=1
        $region14: #{custom-call.12} parent=12 // loop_pre_header
          _
        $region15: #{custom-call.12} parent=12 // loop_header
          %s11 = sphi 0, %s15
          %p12 = scmp.ge.s32.totalorder %s11, 1
          %s16 = sphi %s0, %s0
          %s17 = sphi [#allocation0], [#allocation0]
        $region16: #{custom-call.12} parent=12 // loop_header_branch
          %14 = sbr.rel (%p12) target = $region20
        $region17: #{custom-call.12} parent=12 // loop_body
          %v18 = vld [vmem:[%s16] sm:%s9]
          %19 = vst [vmem:[%s17] sm:%s9] %v18
        $region18: #{custom-call.12} parent=12 // loop_footer
          %s15 = sadd.s32 1, %s11
        $region19: #{custom-call.12} parent=12 // loop_footer_branch
          %10 = sbr.rel target = $region15
        $region20: #{custom-call.12} parent=12 // loop_exit
          _
      $region13: #{custom-call.12} parent=4 // pred_fallthru
        _
    $region5: #{custom-call.12} parent=1 // pred_fallthru
      _
    %34 = vnop
    %v35 = vlaneseq
    %v36 = vand.u32 %v35, 127
    %vm37 = vcmp.lt.s32.totalorder %v36, 8
    %v38 = vlaneseq
    %v39 = vshrl.u32 %v38, 7
    %vm41 = vcmp.eq.s32.totalorder %v39, %v36
    %v42 = vld [vmem:[#allocation0] sm:$0xff]
    %v43 = vsel %vm41, %v42, 0.0
    %44 = vadd.xlane.f32.xlu0 %v43
    %v45 = vpop.xlane.xlu0 %44
    %vm46 = vcmp.le.s32.totalorder %v39, %v36
    %vm47 = vmand %vm46, %vm37
    %v48 = vsel %vm47, %v42, 0.0
    %v49 = vrcp.pop %v45
    %v50 = vmul.f32 %v45, %v49
    %v51 = vsub.f32 1.0, %v50
    %v52 = vmul.f32 %v49, %v51
    %v53 = vadd.f32 %v49, %v52
    %vm54 = vweird.f32 %v45
    %vm55 = vweird.f32 %v49
    %vm56 = vmor %vm54, %vm55
    %v57 = vsel %vm56, %v49, %v53
    %v58 = vand.u32 2147483647, %v45
    %vm59 = vcmp.eq.f32.partialorder %v58, 8.507059e+37
    %v60 = vand.u32 %v45, 2147483648
    %v61 = vor.u32 1.1754944e-38, %v60
    %v62 = vsel %vm59, %v61, %v57
    %v63 = vmul.f32 %v48, %v62
    %64 = vst [vmem:[#allocation2] sm:$0xff] %v63
    %v65 = vlaneseq
    %v66 = vand.u32 %v65, 127
    %v67 = vlaneseq
    %v68 = vshrl.u32 %v67, 7
    %vm70 = vcmp.eq.s32.totalorder %v66, %v68
    %v71 = vlaneseq
    %v72 = vand.u32 %v71, 127
    %vm73 = vcmp.eq.s32.totalorder %v72, 7
    %v74 = vsel %vm73, 1.0, -1.0
    %v75 = vsel %vm70, %v74, 0.0
    %s76 = scalar_lea.vmem [#allocation2], 6
    %v77 = vld [vmem:[%s76] ss:$0 sm:$0xff]
    %v78 = vxor.u32 %v77, 2147483648
    %v79 = vlaneseq
    %v80 = vand.u32 %v79, 127
    %vm81 = vcmp.eq.s32.totalorder %v80, 6
    %v82 = vmul.f32 %v78, %v75
    %83 = vadd.xlane.f32.xlu0 %v82
    %v84 = vpop.xlane.xlu0 %83
    %v85 = vsel %vm81, %v84, %v75
    %s86 = scalar_lea.vmem [#allocation2], 5
    %v87 = vld [vmem:[%s86] ss:$0 sm:$0xff]
    %v88 = vxor.u32 %v87, 2147483648
    %v89 = vlaneseq
    %v90 = vand.u32 %v89, 127
    %vm91 = vcmp.eq.s32.totalorder %v90, 5
    %v92 = vmul.f32 %v88, %v85
    %93 = vadd.xlane.f32.xlu0 %v92
    %v94 = vpop.xlane.xlu0 %93
    %v95 = vsel %vm91, %v94, %v85
    %s96 = scalar_lea.vmem [#allocation2], 4
    %v97 = vld [vmem:[%s96] ss:$0 sm:$0xff]
    %v98 = vxor.u32 %v97, 2147483648
    %v99 = vlaneseq
    %v100 = vand.u32 %v99, 127
    %vm101 = vcmp.eq.s32.totalorder %v100, 4
    %v102 = vmul.f32 %v98, %v95
    %103 = vadd.xlane.f32.xlu0 %v102
    %v104 = vpop.xlane.xlu0 %103
    %v105 = vsel %vm101, %v104, %v95
    %s106 = scalar_lea.vmem [#allocation2], 3
    %v107 = vld [vmem:[%s106] ss:$0 sm:$0xff]
    %v108 = vxor.u32 %v107, 2147483648
    %v109 = vlaneseq
    %v110 = vand.u32 %v109, 127
    %vm111 = vcmp.eq.s32.totalorder %v110, 3
    %v112 = vmul.f32 %v108, %v105
    %113 = vadd.xlane.f32.xlu0 %v112
    %v114 = vpop.xlane.xlu0 %113
    %v115 = vsel %vm111, %v114, %v105
    %s116 = scalar_lea.vmem [#allocation2], 2
    %v117 = vld [vmem:[%s116] ss:$0 sm:$0xff]
    %v118 = vxor.u32 %v117, 2147483648
    %v119 = vlaneseq
    %v120 = vand.u32 %v119, 127
    %vm121 = vcmp.eq.s32.totalorder %v120, 2
    %v122 = vmul.f32 %v118, %v115
    %123 = vadd.xlane.f32.xlu0 %v122
    %v124 = vpop.xlane.xlu0 %123
    %v125 = vsel %vm121, %v124, %v115
    %s126 = scalar_lea.vmem [#allocation2], 1
    %v127 = vld [vmem:[%s126] ss:$0 sm:$0xff]
    %v128 = vxor.u32 %v127, 2147483648
    %v129 = vlaneseq
    %v130 = vand.u32 %v129, 127
    %vm131 = vcmp.eq.s32.totalorder %v130, 1
    %v132 = vmul.f32 %v128, %v125
    %133 = vadd.xlane.f32.xlu0 %v132
    %v134 = vpop.xlane.xlu0 %133
    %v135 = vsel %vm131, %v134, %v125
    %v136 = vld [vmem:[#allocation2] ss:$0 sm:$0xff]
    %v137 = vxor.u32 %v136, 2147483648
    %v138 = vlaneseq
    %v139 = vand.u32 %v138, 127
    %vm140 = vcmp.eq.s32.totalorder %v139, 0
    %v141 = vmul.f32 %v137, %v135
    %142 = vadd.xlane.f32.xlu0 %v141
    %v143 = vpop.xlane.xlu0 %142
    %v144 = vsel %vm140, %v143, %v135
    %v145 = vrcp.pop %v45
    %v146 = vmul.f32 %v45, %v145
    %v147 = vsub.f32 1.0, %v146
    %v148 = vmul.f32 %v145, %v147
    %v149 = vadd.f32 %v145, %v148
    %vm150 = vweird.f32 %v45
    %vm151 = vweird.f32 %v145
    %vm152 = vmor %vm150, %vm151
    %v153 = vsel %vm152, %v145, %v149
    %v154 = vand.u32 2147483647, %v45
    %vm155 = vcmp.eq.f32.partialorder %v154, 8.507059e+37
    %v156 = vand.u32 %v45, 2147483648
    %v157 = vor.u32 1.1754944e-38, %v156
    %v158 = vsel %vm155, %v157, %v153
    %v159 = vmul.f32 %v144, %v158
    %vm160 = vweird.f32 %v45
    %v161 = vsel %vm160, %v144, %v159
    %162 = vst [vmem:[#allocation1] sm:$0xff] %v161
    // Predicated region
    $region36: #{custom-call.12} parent=1 // pred_check
      _
    $region37: #{custom-call.12} parent=1 // pred_check_branch
      %164 = sbr.rel (0) target = $region39
    $region38: #{custom-call.12} parent=1 // pred_region
      // Predicated region
      $region40: #{custom-call.12} parent=38 // pred_check
        _
      $region41: #{custom-call.12} parent=38 // pred_check_branch
        %166 = sbr.rel (0) target = $region43
      $region42: #{custom-call.12} parent=38 // pred_region
        // Predicated region
        $region55: #{custom-call.12} parent=42 // pred_check
          _
        $region56: #{custom-call.12} parent=42 // pred_check_branch
          %182 = sbr.rel (0) target = $region58
        $region57: #{custom-call.12} parent=42 // pred_region
          loop: start=0, step=1, limit=1
          $region59: #{custom-call.12} parent=57 // loop_pre_header
            _
          $region60: #{custom-call.12} parent=57 // loop_header
            %s184 = sphi 0, %s188
            %p185 = scmp.ge.s32.totalorder %s184, 1
            %s189 = sphi [#allocation1], [#allocation1]
            %s190 = sphi %s1, %s1
          $region61: #{custom-call.12} parent=57 // loop_header_branch
            %187 = sbr.rel (%p185) target = $region65
          $region62: #{custom-call.12} parent=57 // loop_body
            %v191 = vld [vmem:[%s189] sm:$0xff]
            %192 = vst [vmem:[%s190] sm:$0xff] %v191
          $region63: #{custom-call.12} parent=57 // loop_footer
            %s188 = sadd.s32 1, %s184
          $region64: #{custom-call.12} parent=57 // loop_footer_branch
            %183 = sbr.rel target = $region60
          $region65: #{custom-call.12} parent=57 // loop_exit
            _
        $region58: #{custom-call.12} parent=42 // pred_fallthru
          _
        // Predicated region
        $region66: #{custom-call.12} parent=42 // pred_check
          _
        $region67: #{custom-call.12} parent=42 // pred_check_branch
          %194 = sbr.rel target = $region69
        $region68: #{custom-call.12} parent=42 // pred_region
          _
        $region69: #{custom-call.12} parent=42 // pred_fallthru
          _
      $region43: #{custom-call.12} parent=38 // pred_fallthru
        _
      // Predicated region
      $region44: #{custom-call.12} parent=38 // pred_check
        _
      $region45: #{custom-call.12} parent=38 // pred_check_branch
        %168 = sbr.rel target = $region47
      $region46: #{custom-call.12} parent=38 // pred_region
        %s170 = ssub.s32 256, 1
        loop: start=0, step=1, limit=1
        $region48: #{custom-call.12} parent=46 // loop_pre_header
          _
        $region49: #{custom-call.12} parent=46 // loop_header
          %s172 = sphi 0, %s176
          %p173 = scmp.ge.s32.totalorder %s172, 1
          %s177 = sphi [#allocation1], [#allocation1]
          %s178 = sphi %s1, %s1
        $region50: #{custom-call.12} parent=46 // loop_header_branch
          %175 = sbr.rel (%p173) target = $region54
        $region51: #{custom-call.12} parent=46 // loop_body
          %v179 = vld [vmem:[%s177] sm:%s170]
          %180 = vst [vmem:[%s178] sm:%s170] %v179
        $region52: #{custom-call.12} parent=46 // loop_footer
          %s176 = sadd.s32 1, %s172
        $region53: #{custom-call.12} parent=46 // loop_footer_branch
          %171 = sbr.rel target = $region49
        $region54: #{custom-call.12} parent=46 // loop_exit
          _
      $region47: #{custom-call.12} parent=38 // pred_fallthru
        _
    $region39: #{custom-call.12} parent=1 // pred_fallthru
      _
    %195 = vnop

// kernel: custom-call.13
$region0: #{custom-call.13}
  %s0 = inlined_call_operand.vmem [shape: f32[1,8,8], index: 0, kind: input, shape index: {}]
  %s1 = inlined_call_operand.vmem [shape: f32[1,8,8], index: 1, kind: output, shape index: {}]
  $region1: #{custom-call.13} parent=0
    #allocation0 [shape = 'u8[4096]{0}', space=vmem, size = 0x1000, scoped, tag = 'operand span for operand 0']
    #allocation1 [shape = 'u8[4096]{0}', space=vmem, size = 0x1000, scoped, tag = 'operand span for operand 1']
    #allocation2 [shape = 'f32[8,8]{1,0}', space=vmem, size = 0x1000, scoped, tag = 'rescaled input a']
    // Predicated region
    $region2: #{custom-call.13} parent=1 // pred_check
      _
    $region3: #{custom-call.13} parent=1 // pred_check_branch
      %3 = sbr.rel (0) target = $region5
    $region4: #{custom-call.13} parent=1 // pred_region
      // Predicated region
      $region6: #{custom-call.13} parent=4 // pred_check
        _
      $region7: #{custom-call.13} parent=4 // pred_check_branch
        %5 = sbr.rel (0) target = $region9
      $region8: #{custom-call.13} parent=4 // pred_region
        // Predicated region
        $region21: #{custom-call.13} parent=8 // pred_check
          _
        $region22: #{custom-call.13} parent=8 // pred_check_branch
          %21 = sbr.rel (0) target = $region24
        $region23: #{custom-call.13} parent=8 // pred_region
          loop: start=0, step=1, limit=1
          $region25: #{custom-call.13} parent=23 // loop_pre_header
            _
          $region26: #{custom-call.13} parent=23 // loop_header
            %s23 = sphi 0, %s27
            %p24 = scmp.ge.s32.totalorder %s23, 1
            %s28 = sphi %s0, %s0
            %s29 = sphi [#allocation0], [#allocation0]
          $region27: #{custom-call.13} parent=23 // loop_header_branch
            %26 = sbr.rel (%p24) target = $region31
          $region28: #{custom-call.13} parent=23 // loop_body
            %v30 = vld [vmem:[%s28] sm:$0xff]
            %31 = vst [vmem:[%s29] sm:$0xff] %v30
          $region29: #{custom-call.13} parent=23 // loop_footer
            %s27 = sadd.s32 1, %s23
          $region30: #{custom-call.13} parent=23 // loop_footer_branch
            %22 = sbr.rel target = $region26
          $region31: #{custom-call.13} parent=23 // loop_exit
            _
        $region24: #{custom-call.13} parent=8 // pred_fallthru
          _
        // Predicated region
        $region32: #{custom-call.13} parent=8 // pred_check
          _
        $region33: #{custom-call.13} parent=8 // pred_check_branch
          %33 = sbr.rel target = $region35
        $region34: #{custom-call.13} parent=8 // pred_region
          _
        $region35: #{custom-call.13} parent=8 // pred_fallthru
          _
      $region9: #{custom-call.13} parent=4 // pred_fallthru
        _
      // Predicated region
      $region10: #{custom-call.13} parent=4 // pred_check
        _
      $region11: #{custom-call.13} parent=4 // pred_check_branch
        %7 = sbr.rel target = $region13
      $region12: #{custom-call.13} parent=4 // pred_region
        %s9 = ssub.s32 256, 1
        loop: start=0, step=1, limit=1
        $region14: #{custom-call.13} parent=12 // loop_pre_header
          _
        $region15: #{custom-call.13} parent=12 // loop_header
          %s11 = sphi 0, %s15
          %p12 = scmp.ge.s32.totalorder %s11, 1
          %s16 = sphi %s0, %s0
          %s17 = sphi [#allocation0], [#allocation0]
        $region16: #{custom-call.13} parent=12 // loop_header_branch
          %14 = sbr.rel (%p12) target = $region20
        $region17: #{custom-call.13} parent=12 // loop_body
          %v18 = vld [vmem:[%s16] sm:%s9]
          %19 = vst [vmem:[%s17] sm:%s9] %v18
        $region18: #{custom-call.13} parent=12 // loop_footer
          %s15 = sadd.s32 1, %s11
        $region19: #{custom-call.13} parent=12 // loop_footer_branch
          %10 = sbr.rel target = $region15
        $region20: #{custom-call.13} parent=12 // loop_exit
          _
      $region13: #{custom-call.13} parent=4 // pred_fallthru
        _
    $region5: #{custom-call.13} parent=1 // pred_fallthru
      _
    %34 = vnop
    %v35 = vlaneseq
    %v36 = vand.u32 %v35, 127
    %vm37 = vcmp.lt.s32.totalorder %v36, 8
    %v38 = vlaneseq
    %v39 = vshrl.u32 %v38, 7
    %vm41 = vcmp.eq.s32.totalorder %v39, %v36
    %v42 = vld [vmem:[#allocation0] sm:$0xff]
    %v43 = vsel %vm41, %v42, 0.0
    %44 = vadd.xlane.f32.xlu0 %v43
    %v45 = vpop.xlane.xlu0 %44
    %vm46 = vcmp.ge.s32.totalorder %v39, %v36
    %vm47 = vmand %vm46, %vm37
    %v48 = vsel %vm47, %v42, 0.0
    %v49 = vrcp.pop %v45
    %v50 = vmul.f32 %v45, %v49
    %v51 = vsub.f32 1.0, %v50
    %v52 = vmul.f32 %v49, %v51
    %v53 = vadd.f32 %v49, %v52
    %vm54 = vweird.f32 %v45
    %vm55 = vweird.f32 %v49
    %vm56 = vmor %vm54, %vm55
    %v57 = vsel %vm56, %v49, %v53
    %v58 = vand.u32 2147483647, %v45
    %vm59 = vcmp.eq.f32.partialorder %v58, 8.507059e+37
    %v60 = vand.u32 %v45, 2147483648
    %v61 = vor.u32 1.1754944e-38, %v60
    %v62 = vsel %vm59, %v61, %v57
    %v63 = vmul.f32 %v48, %v62
    %64 = vst [vmem:[#allocation2] sm:$0xff] %v63
    %v65 = vlaneseq
    %v66 = vand.u32 %v65, 127
    %v67 = vlaneseq
    %v68 = vshrl.u32 %v67, 7
    %vm70 = vcmp.eq.s32.totalorder %v66, %v68
    %v71 = vlaneseq
    %v72 = vand.u32 %v71, 127
    %vm73 = vcmp.eq.s32.totalorder %v72, 0
    %v74 = vsel %vm73, 1.0, -1.0
    %v75 = vsel %vm70, %v74, 0.0
    %s76 = scalar_lea.vmem [#allocation2], 1
    %v77 = vld [vmem:[%s76] ss:$0 sm:$0xff]
    %v78 = vxor.u32 %v77, 2147483648
    %v79 = vlaneseq
    %v80 = vand.u32 %v79, 127
    %vm81 = vcmp.eq.s32.totalorder %v80, 1
    %v82 = vmul.f32 %v78, %v75
    %83 = vadd.xlane.f32.xlu0 %v82
    %v84 = vpop.xlane.xlu0 %83
    %v85 = vsel %vm81, %v84, %v75
    %s86 = scalar_lea.vmem [#allocation2], 2
    %v87 = vld [vmem:[%s86] ss:$0 sm:$0xff]
    %v88 = vxor.u32 %v87, 2147483648
    %v89 = vlaneseq
    %v90 = vand.u32 %v89, 127
    %vm91 = vcmp.eq.s32.totalorder %v90, 2
    %v92 = vmul.f32 %v88, %v85
    %93 = vadd.xlane.f32.xlu0 %v92
    %v94 = vpop.xlane.xlu0 %93
    %v95 = vsel %vm91, %v94, %v85
    %s96 = scalar_lea.vmem [#allocation2], 3
    %v97 = vld [vmem:[%s96] ss:$0 sm:$0xff]
    %v98 = vxor.u32 %v97, 2147483648
    %v99 = vlaneseq
    %v100 = vand.u32 %v99, 127
    %vm101 = vcmp.eq.s32.totalorder %v100, 3
    %v102 = vmul.f32 %v98, %v95
    %103 = vadd.xlane.f32.xlu0 %v102
    %v104 = vpop.xlane.xlu0 %103
    %v105 = vsel %vm101, %v104, %v95
    %s106 = scalar_lea.vmem [#allocation2], 4
    %v107 = vld [vmem:[%s106] ss:$0 sm:$0xff]
    %v108 = vxor.u32 %v107, 2147483648
    %v109 = vlaneseq
    %v110 = vand.u32 %v109, 127
    %vm111 = vcmp.eq.s32.totalorder %v110, 4
    %v112 = vmul.f32 %v108, %v105
    %113 = vadd.xlane.f32.xlu0 %v112
    %v114 = vpop.xlane.xlu0 %113
    %v115 = vsel %vm111, %v114, %v105
    %s116 = scalar_lea.vmem [#allocation2], 5
    %v117 = vld [vmem:[%s116] ss:$0 sm:$0xff]
    %v118 = vxor.u32 %v117, 2147483648
    %v119 = vlaneseq
    %v120 = vand.u32 %v119, 127
    %vm121 = vcmp.eq.s32.totalorder %v120, 5
    %v122 = vmul.f32 %v118, %v115
    %123 = vadd.xlane.f32.xlu0 %v122
    %v124 = vpop.xlane.xlu0 %123
    %v125 = vsel %vm121, %v124, %v115
    %s126 = scalar_lea.vmem [#allocation2], 6
    %v127 = vld [vmem:[%s126] ss:$0 sm:$0xff]
    %v128 = vxor.u32 %v127, 2147483648
    %v129 = vlaneseq
    %v130 = vand.u32 %v129, 127
    %vm131 = vcmp.eq.s32.totalorder %v130, 6
    %v132 = vmul.f32 %v128, %v125
    %133 = vadd.xlane.f32.xlu0 %v132
    %v134 = vpop.xlane.xlu0 %133
    %v135 = vsel %vm131, %v134, %v125
    %s136 = scalar_lea.vmem [#allocation2], 7
    %v137 = vld [vmem:[%s136] ss:$0 sm:$0xff]
    %v138 = vxor.u32 %v137, 2147483648
    %v139 = vlaneseq
    %v140 = vand.u32 %v139, 127
    %vm141 = vcmp.eq.s32.totalorder %v140, 7
    %v142 = vmul.f32 %v138, %v135
    %143 = vadd.xlane.f32.xlu0 %v142
    %v144 = vpop.xlane.xlu0 %143
    %v145 = vsel %vm141, %v144, %v135
    %v146 = vrcp.pop %v45
    %v147 = vmul.f32 %v45, %v146
    %v148 = vsub.f32 1.0, %v147
    %v149 = vmul.f32 %v146, %v148
    %v150 = vadd.f32 %v146, %v149
    %vm151 = vweird.f32 %v45
    %vm152 = vweird.f32 %v146
    %vm153 = vmor %vm151, %vm152
    %v154 = vsel %vm153, %v146, %v150
    %v155 = vand.u32 2147483647, %v45
    %vm156 = vcmp.eq.f32.partialorder %v155, 8.507059e+37
    %v157 = vand.u32 %v45, 2147483648
    %v158 = vor.u32 1.1754944e-38, %v157
    %v159 = vsel %vm156, %v158, %v154
    %v160 = vmul.f32 %v145, %v159
    %vm161 = vweird.f32 %v45
    %v162 = vsel %vm161, %v145, %v160
    %163 = vst [vmem:[#allocation1] sm:$0xff] %v162
    // Predicated region
    $region36: #{custom-call.13} parent=1 // pred_check
      _
    $region37: #{custom-call.13} parent=1 // pred_check_branch
      %165 = sbr.rel (0) target = $region39
    $region38: #{custom-call.13} parent=1 // pred_region
      // Predicated region
      $region40: #{custom-call.13} parent=38 // pred_check
        _
      $region41: #{custom-call.13} parent=38 // pred_check_branch
        %167 = sbr.rel (0) target = $region43
      $region42: #{custom-call.13} parent=38 // pred_region
        // Predicated region
        $region55: #{custom-call.13} parent=42 // pred_check
          _
        $region56: #{custom-call.13} parent=42 // pred_check_branch
          %183 = sbr.rel (0) target = $region58
        $region57: #{custom-call.13} parent=42 // pred_region
          loop: start=0, step=1, limit=1
          $region59: #{custom-call.13} parent=57 // loop_pre_header
            _
          $region60: #{custom-call.13} parent=57 // loop_header
            %s185 = sphi 0, %s189
            %p186 = scmp.ge.s32.totalorder %s185, 1
            %s190 = sphi [#allocation1], [#allocation1]
            %s191 = sphi %s1, %s1
          $region61: #{custom-call.13} parent=57 // loop_header_branch
            %188 = sbr.rel (%p186) target = $region65
          $region62: #{custom-call.13} parent=57 // loop_body
            %v192 = vld [vmem:[%s190] sm:$0xff]
            %193 = vst [vmem:[%s191] sm:$0xff] %v192
          $region63: #{custom-call.13} parent=57 // loop_footer
            %s189 = sadd.s32 1, %s185
          $region64: #{custom-call.13} parent=57 // loop_footer_branch
            %184 = sbr.rel target = $region60
          $region65: #{custom-call.13} parent=57 // loop_exit
            _
        $region58: #{custom-call.13} parent=42 // pred_fallthru
          _
        // Predicated region
        $region66: #{custom-call.13} parent=42 // pred_check
          _
        $region67: #{custom-call.13} parent=42 // pred_check_branch
          %195 = sbr.rel target = $region69
        $region68: #{custom-call.13} parent=42 // pred_region
          _
        $region69: #{custom-call.13} parent=42 // pred_fallthru
          _
      $region43: #{custom-call.13} parent=38 // pred_fallthru
        _
      // Predicated region
      $region44: #{custom-call.13} parent=38 // pred_check
        _
      $region45: #{custom-call.13} parent=38 // pred_check_branch
        %169 = sbr.rel target = $region47
      $region46: #{custom-call.13} parent=38 // pred_region
        %s171 = ssub.s32 256, 1
        loop: start=0, step=1, limit=1
        $region48: #{custom-call.13} parent=46 // loop_pre_header
          _
        $region49: #{custom-call.13} parent=46 // loop_header
          %s173 = sphi 0, %s177
          %p174 = scmp.ge.s32.totalorder %s173, 1
          %s178 = sphi [#allocation1], [#allocation1]
          %s179 = sphi %s1, %s1
        $region50: #{custom-call.13} parent=46 // loop_header_branch
          %176 = sbr.rel (%p174) target = $region54
        $region51: #{custom-call.13} parent=46 // loop_body
          %v180 = vld [vmem:[%s178] sm:%s171]
          %181 = vst [vmem:[%s179] sm:%s171] %v180
        $region52: #{custom-call.13} parent=46 // loop_footer
          %s177 = sadd.s32 1, %s173
        $region53: #{custom-call.13} parent=46 // loop_footer_branch
          %172 = sbr.rel target = $region49
        $region54: #{custom-call.13} parent=46 // loop_exit
          _
      $region47: #{custom-call.13} parent=38 // pred_fallthru
        _
    $region39: #{custom-call.13} parent=1 // pred_fallthru
      _
    %196 = vnop

// kernel: decoder_forward.1
$region0: #{decoder_forward.1}
  #allocation0 [shape = 'u32[]', space=smem, size = 0x4, offset = 0x4, fixed_abs, tag = 'smem constant byte address 0x4 - core index']
  #allocation1 [shape = 'u32[72,128]{1,0:T(1,128)}', space=vmem, size = 0x9000, scoped, tag = 'internal scratch']
  %s0 = inlined_call_operand.vmem [shape: f32[4,16], index: 0, kind: input, shape index: {}]
  %s1 = inlined_call_operand.vmem [shape: f32[16,16], index: 1, kind: input, shape index: {}]
  %s2 = inlined_call_operand.vmem [shape: f32[4,16], index: 2, kind: input, shape index: {}]
  %s3 = inlined_call_operand.vmem [shape: f32[32,4], index: 3, kind: input, shape index: {}]
  %s4 = inlined_call_operand.vmem [shape: f32[32,1], index: 4, kind: input, shape index: {}]
  %s5 = inlined_call_operand.vmem [shape: f32[4,32], index: 5, kind: input, shape index: {}]
  %s6 = inlined_call_operand.vmem [shape: f32[4,1], index: 6, kind: input, shape index: {}]
  %s7 = inlined_call_operand.vmem [shape: f32[4,16], index: 7, kind: output, shape index: {0}]
  %s8 = inlined_call_operand.vmem [shape: f32[4,16], index: 8, kind: output, shape index: {1}]
  %9 = xla_tuple %s7, %s8
  %s10 = sld [smem:[#allocation0]]
  $region46: #{decoder_forward.1} parent=0
    _
  %s12 = ssub.s32 1, %s10
  %s13 = scalar_select 0, %s12, %s10
  // Predicated region
  $region2: #{decoder_forward.1} parent=0 // pred_check
    _
  $region3: #{decoder_forward.1} parent=0 // pred_check_branch
    %15 = sbr.rel (0) target = $region5
  $region4: #{decoder_forward.1} parent=0 // pred_region
    _
  $region5: #{decoder_forward.1} parent=0 // pred_fallthru
    _
  // Predicated region
  $region6: #{decoder_forward.1} parent=0 // pred_check
    _
  $region7: #{decoder_forward.1} parent=0 // pred_check_branch
    %17 = sbr.rel (0) target = $region9
  $region8: #{decoder_forward.1} parent=0 // pred_region
    _
  $region9: #{decoder_forward.1} parent=0 // pred_fallthru
    _
  // Predicated region
  $region10: #{decoder_forward.1} parent=0 // pred_check
    _
  $region11: #{decoder_forward.1} parent=0 // pred_check_branch
    %19 = sbr.rel (0) target = $region13
  $region12: #{decoder_forward.1} parent=0 // pred_region
    _
  $region13: #{decoder_forward.1} parent=0 // pred_fallthru
    _
  // Predicated region
  $region14: #{decoder_forward.1} parent=0 // pred_check
    _
  $region15: #{decoder_forward.1} parent=0 // pred_check_branch
    %21 = sbr.rel (0) target = $region17
  $region16: #{decoder_forward.1} parent=0 // pred_region
    _
  $region17: #{decoder_forward.1} parent=0 // pred_fallthru
    _
  // Predicated region
  $region18: #{decoder_forward.1} parent=0 // pred_check
    _
  $region19: #{decoder_forward.1} parent=0 // pred_check_branch
    %23 = sbr.rel (0) target = $region21
  $region20: #{decoder_forward.1} parent=0 // pred_region
    _
  $region21: #{decoder_forward.1} parent=0 // pred_fallthru
    _
  // Predicated region
  $region22: #{decoder_forward.1} parent=0 // pred_check
    _
  $region23: #{decoder_forward.1} parent=0 // pred_check_branch
    %25 = sbr.rel (0) target = $region25
  $region24: #{decoder_forward.1} parent=0 // pred_region
    _
  $region25: #{decoder_forward.1} parent=0 // pred_fallthru
    _
  // Predicated region
  $region26: #{decoder_forward.1} parent=0 // pred_check
    _
  $region27: #{decoder_forward.1} parent=0 // pred_check_branch
    %27 = sbr.rel (0) target = $region29
  $region28: #{decoder_forward.1} parent=0 // pred_region
    _
  $region29: #{decoder_forward.1} parent=0 // pred_fallthru
    _
  %v28 = vld [vmem:[%s0] sm:$0xf]
  %v29 = vld [vmem:[%s1] sm:$0xff]
  %v30 = vld [vmem:[%s1 + $0x8] sm:$0xff]
  %v31 = vld [vmem:[%s2] sm:$0xf]
  %vm32 = vcmask 130048
  %v34 = vsel %vm32, %v28, 0
  %36 = vmatpush.msra.mxu0 0.0
  %37 = vmatpush.msra.mxu0 0.0
  %38 = vmatpush.msra.mxu0 0.0
  %39 = vmatpush.msra.mxu0 0.0
  %40 = vmatpush.msra.mxu0 0.0
  %41 = vmatpush.msra.mxu0 0.0
  %42 = vmatpush.msra.mxu0 0.0
  %43 = vmatpush.msra.mxu0 0.0
  %44 = vmatpush.msra.mxu0 0.0
  %45 = vmatpush.msra.mxu0 0.0
  %46 = vmatpush.msra.mxu0 0.0
  %47 = vmatpush.msra.mxu0 0.0
  %48 = vmatpush.msra.mxu0 0.0
  %49 = vmatpush.msra.mxu0 0.0
  %v50 = vand.u32 %v30, 4294901760
  %51 = vmatpush.msra.mxu0 %v50
  %v52 = vand.u32 %v29, 4294901760
  %53 = vmatpush.msra.mxu0 %v52
  %v54 = vand.u32 %v34, 4294901760
  %v55 = vsub.f32 %v34, %v54
  %v56 = vand.u32 %v55, 4294901760
  %v57 = vsub.f32 %v55, %v56
  %v58 = vand.u32 %v57, 4294901760
  %59 = vmatmul.f32.gmra.mxu0 %v58
  %v60 = vpop.f32.mrf.mxu0
  %v61 = vadd.f32 %v31, %v60
  %62 = vdwg.mxu0
  %63 = vmatpush.msra.mxu0 0.0
  %64 = vmatpush.msra.mxu0 0.0
  %65 = vmatpush.msra.mxu0 0.0
  %66 = vmatpush.msra.mxu0 0.0
  %67 = vmatpush.msra.mxu0 0.0
  %68 = vmatpush.msra.mxu0 0.0
  %69 = vmatpush.msra.mxu0 0.0
  %70 = vmatpush.msra.mxu0 0.0
  %71 = vmatpush.msra.mxu0 0.0
  %72 = vmatpush.msra.mxu0 0.0
  %73 = vmatpush.msra.mxu0 0.0
  %74 = vmatpush.msra.mxu0 0.0
  %75 = vmatpush.msra.mxu0 0.0
  %76 = vmatpush.msra.mxu0 0.0
  %v77 = vand.u32 %v30, 4294901760
  %v78 = vsub.f32 %v30, %v77
  %v79 = vand.u32 %v78, 4294901760
  %v80 = vsub.f32 %v78, %v79
  %v81 = vand.u32 %v80, 4294901760
  %82 = vmatpush.msra.mxu0 %v81
  %v83 = vand.u32 %v29, 4294901760
  %v84 = vsub.f32 %v29, %v83
  %v85 = vand.u32 %v84, 4294901760
  %v86 = vsub.f32 %v84, %v85
  %v87 = vand.u32 %v86, 4294901760
  %88 = vmatpush.msra.mxu0 %v87
  %v89 = vand.u32 %v34, 4294901760
  %90 = vmatmul.f32.gmra.mxu0 %v89
  %v91 = vpop.f32.mrf.mxu0
  %v92 = vadd.f32 %v61, %v91
  %93 = vdwg.mxu0
  %94 = vmatpush.msra.mxu0 0.0
  %95 = vmatpush.msra.mxu0 0.0
  %96 = vmatpush.msra.mxu0 0.0
  %97 = vmatpush.msra.mxu0 0.0
  %98 = vmatpush.msra.mxu0 0.0
  %99 = vmatpush.msra.mxu0 0.0
  %100 = vmatpush.msra.mxu0 0.0
  %101 = vmatpush.msra.mxu0 0.0
  %102 = vmatpush.msra.mxu0 0.0
  %103 = vmatpush.msra.mxu0 0.0
  %104 = vmatpush.msra.mxu0 0.0
  %105 = vmatpush.msra.mxu0 0.0
  %106 = vmatpush.msra.mxu0 0.0
  %107 = vmatpush.msra.mxu0 0.0
  %v108 = vand.u32 %v30, 4294901760
  %v109 = vsub.f32 %v30, %v108
  %110 = vmatpush.msra.mxu0 %v109
  %v111 = vand.u32 %v29, 4294901760
  %v112 = vsub.f32 %v29, %v111
  %113 = vmatpush.msra.mxu0 %v112
  %v114 = vand.u32 %v34, 4294901760
  %v115 = vsub.f32 %v34, %v114
  %116 = vmatmul.f32.gmra.mxu0 %v115
  %v117 = vpop.f32.mrf.mxu0
  %v118 = vadd.f32 %v92, %v117
  %119 = vdwg.mxu0
  %120 = vmatpush.msra.mxu0 0.0
  %121 = vmatpush.msra.mxu0 0.0
  %122 = vmatpush.msra.mxu0 0.0
  %123 = vmatpush.msra.mxu0 0.0
  %124 = vmatpush.msra.mxu0 0.0
  %125 = vmatpush.msra.mxu0 0.0
  %126 = vmatpush.msra.mxu0 0.0
  %127 = vmatpush.msra.mxu0 0.0
  %128 = vmatpush.msra.mxu0 0.0
  %129 = vmatpush.msra.mxu0 0.0
  %130 = vmatpush.msra.mxu0 0.0
  %131 = vmatpush.msra.mxu0 0.0
  %132 = vmatpush.msra.mxu0 0.0
  %133 = vmatpush.msra.mxu0 0.0
  %v134 = vand.u32 %v30, 4294901760
  %135 = vmatpush.msra.mxu0 %v134
  %v136 = vand.u32 %v29, 4294901760
  %137 = vmatpush.msra.mxu0 %v136
  %v138 = vand.u32 %v34, 4294901760
  %v139 = vsub.f32 %v34, %v138
  %v140 = vand.u32 %v139, 4294901760
  %141 = vmatmul.f32.gmra.mxu0 %v140
  %v142 = vpop.f32.mrf.mxu0
  %v143 = vadd.f32 %v118, %v142
  %144 = vdwg.mxu0
  %145 = vmatpush.msra.mxu0 0.0
  %146 = vmatpush.msra.mxu0 0.0
  %147 = vmatpush.msra.mxu0 0.0
  %148 = vmatpush.msra.mxu0 0.0
  %149 = vmatpush.msra.mxu0 0.0
  %150 = vmatpush.msra.mxu0 0.0
  %151 = vmatpush.msra.mxu0 0.0
  %152 = vmatpush.msra.mxu0 0.0
  %153 = vmatpush.msra.mxu0 0.0
  %154 = vmatpush.msra.mxu0 0.0
  %155 = vmatpush.msra.mxu0 0.0
  %156 = vmatpush.msra.mxu0 0.0
  %157 = vmatpush.msra.mxu0 0.0
  %158 = vmatpush.msra.mxu0 0.0
  %v159 = vand.u32 %v30, 4294901760
  %v160 = vsub.f32 %v30, %v159
  %v161 = vand.u32 %v160, 4294901760
  %162 = vmatpush.msra.mxu0 %v161
  %v163 = vand.u32 %v29, 4294901760
  %v164 = vsub.f32 %v29, %v163
  %v165 = vand.u32 %v164, 4294901760
  %166 = vmatpush.msra.mxu0 %v165
  %v167 = vand.u32 %v34, 4294901760
  %168 = vmatmul.f32.gmra.mxu0 %v167
  %v169 = vpop.f32.mrf.mxu0
  %v170 = vadd.f32 %v143, %v169
  %171 = vdwg.mxu0
  %172 = vmatpush.msra.mxu0 0.0
  %173 = vmatpush.msra.mxu0 0.0
  %174 = vmatpush.msra.mxu0 0.0
  %175 = vmatpush.msra.mxu0 0.0
  %176 = vmatpush.msra.mxu0 0.0
  %177 = vmatpush.msra.mxu0 0.0
  %178 = vmatpush.msra.mxu0 0.0
  %179 = vmatpush.msra.mxu0 0.0
  %180 = vmatpush.msra.mxu0 0.0
  %181 = vmatpush.msra.mxu0 0.0
  %182 = vmatpush.msra.mxu0 0.0
  %183 = vmatpush.msra.mxu0 0.0
  %184 = vmatpush.msra.mxu0 0.0
  %185 = vmatpush.msra.mxu0 0.0
  %v186 = vand.u32 %v30, 4294901760
  %187 = vmatpush.msra.mxu0 %v186
  %v188 = vand.u32 %v29, 4294901760
  %189 = vmatpush.msra.mxu0 %v188
  %v190 = vand.u32 %v34, 4294901760
  %191 = vmatmul.f32.gmra.mxu0 %v190
  %v192 = vpop.f32.mrf.mxu0
  %v193 = vadd.f32 %v170, %v192
  %194 = vdwg.mxu0
  %vm195 = vcmask 125952
  %196 = vst.msk [vmem:[%s8] sm:$0xf] %vm195, %v193
  %v197 = vld [vmem:[%s3] sm:$0xff]
  %v198 = vld [vmem:[%s3 + $0x8] sm:$0xff]
  %v199 = vld [vmem:[%s3 + $0x10] sm:$0xff]
  %v200 = vld [vmem:[%s3 + $0x18] sm:$0xff]
  %v201 = vld [vmem:[%s4] sm:$0xff]
  %v202 = vld [vmem:[%s4 + $0x8] sm:$0xff]
  %v203 = vld [vmem:[%s4 + $0x10] sm:$0xff]
  %v204 = vld [vmem:[%s4 + $0x18] sm:$0xff]
  %206 = vset.pattern.permute.xlu0 0
  %207 = vperm.xlu0 %206, %v201
  %v208 = vpop.permute.xlu0 %207
  %211 = vset.pattern.permute.xlu0 0
  %212 = vperm.xlu0 %211, %v202
  %v213 = vpop.permute.xlu0 %212
  %216 = vset.pattern.permute.xlu0 0
  %217 = vperm.xlu0 %216, %v203
  %v218 = vpop.permute.xlu0 %217
  %221 = vset.pattern.permute.xlu0 0
  %222 = vperm.xlu0 %221, %v204
  %v223 = vpop.permute.xlu0 %222
  %vm225 = vcmask 31744
  %v227 = vsel %vm225, %v197, 0
  %v230 = vsel %vm225, %v198, 0
  %v233 = vsel %vm225, %v199, 0
  %v236 = vsel %vm225, %v200, 0
  %vm238 = vcmask 1043456
  %v240 = vsel %vm238, %v193, 0
  %242 = vmatpush.msra.mxu0 0.0
  %243 = vmatpush.msra.mxu0 0.0
  %244 = vmatpush.msra.mxu0 0.0
  %245 = vmatpush.msra.mxu0 0.0
  %246 = vmatpush.msra.mxu0 0.0
  %247 = vmatpush.msra.mxu0 0.0
  %248 = vmatpush.msra.mxu0 0.0
  %249 = vmatpush.msra.mxu0 0.0
  %250 = vmatpush.msra.mxu0 0.0
  %251 = vmatpush.msra.mxu0 0.0
  %252 = vmatpush.msra.mxu0 0.0
  %253 = vmatpush.msra.mxu0 0.0
  %254 = vmatpush.msra.mxu0 0.0
  %255 = vmatpush.msra.mxu0 0.0
  %256 = vmatpush.msra.mxu0 0.0
  %v257 = vand.u32 %v240, 4294901760
  %258 = vmatpush.msra.mxu0 %v257
  %v259 = vand.u32 %v227, 4294901760
  %v260 = vsub.f32 %v227, %v259
  %v261 = vand.u32 %v260, 4294901760
  %v262 = vsub.f32 %v260, %v261
  %v263 = vand.u32 %v262, 4294901760
  %264 = vmatmul.f32.gmra.mxu0 %v263
  %v265 = vpop.f32.mrf.mxu0
  %v266 = vadd.f32 %v208, %v265
  %v267 = vand.u32 %v230, 4294901760
  %v268 = vsub.f32 %v230, %v267
  %v269 = vand.u32 %v268, 4294901760
  %v270 = vsub.f32 %v268, %v269
  %v271 = vand.u32 %v270, 4294901760
  %272 = vmatmul.f32.gmra.mxu0 %v271
  %v273 = vpop.f32.mrf.mxu0
  %v274 = vadd.f32 %v213, %v273
  %v275 = vand.u32 %v233, 4294901760
  %v276 = vsub.f32 %v233, %v275
  %v277 = vand.u32 %v276, 4294901760
  %v278 = vsub.f32 %v276, %v277
  %v279 = vand.u32 %v278, 4294901760
  %280 = vmatmul.f32.gmra.mxu0 %v279
  %v281 = vpop.f32.mrf.mxu0
  %v282 = vadd.f32 %v218, %v281
  %v283 = vand.u32 %v236, 4294901760
  %v284 = vsub.f32 %v236, %v283
  %v285 = vand.u32 %v284, 4294901760
  %v286 = vsub.f32 %v284, %v285
  %v287 = vand.u32 %v286, 4294901760
  %288 = vmatmul.f32.gmra.mxu0 %v287
  %v289 = vpop.f32.mrf.mxu0
  %v290 = vadd.f32 %v223, %v289
  %291 = vdwg.mxu0
  %292 = vmatpush.msra.mxu0 0.0
  %293 = vmatpush.msra.mxu0 0.0
  %294 = vmatpush.msra.mxu0 0.0
  %295 = vmatpush.msra.mxu0 0.0
  %296 = vmatpush.msra.mxu0 0.0
  %297 = vmatpush.msra.mxu0 0.0
  %298 = vmatpush.msra.mxu0 0.0
  %299 = vmatpush.msra.mxu0 0.0
  %300 = vmatpush.msra.mxu0 0.0
  %301 = vmatpush.msra.mxu0 0.0
  %302 = vmatpush.msra.mxu0 0.0
  %303 = vmatpush.msra.mxu0 0.0
  %304 = vmatpush.msra.mxu0 0.0
  %305 = vmatpush.msra.mxu0 0.0
  %306 = vmatpush.msra.mxu0 0.0
  %v307 = vand.u32 %v240, 4294901760
  %v308 = vsub.f32 %v240, %v307
  %v309 = vand.u32 %v308, 4294901760
  %v310 = vsub.f32 %v308, %v309
  %v311 = vand.u32 %v310, 4294901760
  %312 = vmatpush.msra.mxu0 %v311
  %v313 = vand.u32 %v227, 4294901760
  %314 = vmatmul.f32.gmra.mxu0 %v313
  %v315 = vpop.f32.mrf.mxu0
  %v316 = vadd.f32 %v266, %v315
  %v317 = vand.u32 %v230, 4294901760
  %318 = vmatmul.f32.gmra.mxu0 %v317
  %v319 = vpop.f32.mrf.mxu0
  %v320 = vadd.f32 %v274, %v319
  %v321 = vand.u32 %v233, 4294901760
  %322 = vmatmul.f32.gmra.mxu0 %v321
  %v323 = vpop.f32.mrf.mxu0
  %v324 = vadd.f32 %v282, %v323
  %v325 = vand.u32 %v236, 4294901760
  %326 = vmatmul.f32.gmra.mxu0 %v325
  %v327 = vpop.f32.mrf.mxu0
  %v328 = vadd.f32 %v290, %v327
  %329 = vdwg.mxu0
  %330 = vmatpush.msra.mxu0 0.0
  %331 = vmatpush.msra.mxu0 0.0
  %332 = vmatpush.msra.mxu0 0.0
  %333 = vmatpush.msra.mxu0 0.0
  %334 = vmatpush.msra.mxu0 0.0
  %335 = vmatpush.msra.mxu0 0.0
  %336 = vmatpush.msra.mxu0 0.0
  %337 = vmatpush.msra.mxu0 0.0
  %338 = vmatpush.msra.mxu0 0.0
  %339 = vmatpush.msra.mxu0 0.0
  %340 = vmatpush.msra.mxu0 0.0
  %341 = vmatpush.msra.mxu0 0.0
  %342 = vmatpush.msra.mxu0 0.0
  %343 = vmatpush.msra.mxu0 0.0
  %344 = vmatpush.msra.mxu0 0.0
  %v345 = vand.u32 %v240, 4294901760
  %v346 = vsub.f32 %v240, %v345
  %347 = vmatpush.msra.mxu0 %v346
  %v348 = vand.u32 %v227, 4294901760
  %v349 = vsub.f32 %v227, %v348
  %350 = vmatmul.f32.gmra.mxu0 %v349
  %v351 = vpop.f32.mrf.mxu0
  %v352 = vadd.f32 %v316, %v351
  %v353 = vand.u32 %v230, 4294901760
  %v354 = vsub.f32 %v230, %v353
  %355 = vmatmul.f32.gmra.mxu0 %v354
  %v356 = vpop.f32.mrf.mxu0
  %v357 = vadd.f32 %v320, %v356
  %v358 = vand.u32 %v233, 4294901760
  %v359 = vsub.f32 %v233, %v358
  %360 = vmatmul.f32.gmra.mxu0 %v359
  %v361 = vpop.f32.mrf.mxu0
  %v362 = vadd.f32 %v324, %v361
  %v363 = vand.u32 %v236, 4294901760
  %v364 = vsub.f32 %v236, %v363
  %365 = vmatmul.f32.gmra.mxu0 %v364
  %v366 = vpop.f32.mrf.mxu0
  %v367 = vadd.f32 %v328, %v366
  %368 = vdwg.mxu0
  %369 = vmatpush.msra.mxu0 0.0
  %370 = vmatpush.msra.mxu0 0.0
  %371 = vmatpush.msra.mxu0 0.0
  %372 = vmatpush.msra.mxu0 0.0
  %373 = vmatpush.msra.mxu0 0.0
  %374 = vmatpush.msra.mxu0 0.0
  %375 = vmatpush.msra.mxu0 0.0
  %376 = vmatpush.msra.mxu0 0.0
  %377 = vmatpush.msra.mxu0 0.0
  %378 = vmatpush.msra.mxu0 0.0
  %379 = vmatpush.msra.mxu0 0.0
  %380 = vmatpush.msra.mxu0 0.0
  %381 = vmatpush.msra.mxu0 0.0
  %382 = vmatpush.msra.mxu0 0.0
  %383 = vmatpush.msra.mxu0 0.0
  %v384 = vand.u32 %v240, 4294901760
  %385 = vmatpush.msra.mxu0 %v384
  %v386 = vand.u32 %v227, 4294901760
  %v387 = vsub.f32 %v227, %v386
  %v388 = vand.u32 %v387, 4294901760
  %389 = vmatmul.f32.gmra.mxu0 %v388
  %v390 = vpop.f32.mrf.mxu0
  %v391 = vadd.f32 %v352, %v390
  %v392 = vand.u32 %v230, 4294901760
  %v393 = vsub.f32 %v230, %v392
  %v394 = vand.u32 %v393, 4294901760
  %395 = vmatmul.f32.gmra.mxu0 %v394
  %v396 = vpop.f32.mrf.mxu0
  %v397 = vadd.f32 %v357, %v396
  %v398 = vand.u32 %v233, 4294901760
  %v399 = vsub.f32 %v233, %v398
  %v400 = vand.u32 %v399, 4294901760
  %401 = vmatmul.f32.gmra.mxu0 %v400
  %v402 = vpop.f32.mrf.mxu0
  %v403 = vadd.f32 %v362, %v402
  %v404 = vand.u32 %v236, 4294901760
  %v405 = vsub.f32 %v236, %v404
  %v406 = vand.u32 %v405, 4294901760
  %407 = vmatmul.f32.gmra.mxu0 %v406
  %v408 = vpop.f32.mrf.mxu0
  %v409 = vadd.f32 %v367, %v408
  %410 = vdwg.mxu0
  %411 = vmatpush.msra.mxu0 0.0
  %412 = vmatpush.msra.mxu0 0.0
  %413 = vmatpush.msra.mxu0 0.0
  %414 = vmatpush.msra.mxu0 0.0
  %415 = vmatpush.msra.mxu0 0.0
  %416 = vmatpush.msra.mxu0 0.0
  %417 = vmatpush.msra.mxu0 0.0
  %418 = vmatpush.msra.mxu0 0.0
  %419 = vmatpush.msra.mxu0 0.0
  %420 = vmatpush.msra.mxu0 0.0
  %421 = vmatpush.msra.mxu0 0.0
  %422 = vmatpush.msra.mxu0 0.0
  %423 = vmatpush.msra.mxu0 0.0
  %424 = vmatpush.msra.mxu0 0.0
  %425 = vmatpush.msra.mxu0 0.0
  %v426 = vand.u32 %v240, 4294901760
  %v427 = vsub.f32 %v240, %v426
  %v428 = vand.u32 %v427, 4294901760
  %429 = vmatpush.msra.mxu0 %v428
  %v430 = vand.u32 %v227, 4294901760
  %431 = vmatmul.f32.gmra.mxu0 %v430
  %v432 = vpop.f32.mrf.mxu0
  %v433 = vadd.f32 %v391, %v432
  %v434 = vand.u32 %v230, 4294901760
  %435 = vmatmul.f32.gmra.mxu0 %v434
  %v436 = vpop.f32.mrf.mxu0
  %v437 = vadd.f32 %v397, %v436
  %v438 = vand.u32 %v233, 4294901760
  %439 = vmatmul.f32.gmra.mxu0 %v438
  %v440 = vpop.f32.mrf.mxu0
  %v441 = vadd.f32 %v403, %v440
  %v442 = vand.u32 %v236, 4294901760
  %443 = vmatmul.f32.gmra.mxu0 %v442
  %v444 = vpop.f32.mrf.mxu0
  %v445 = vadd.f32 %v409, %v444
  %446 = vdwg.mxu0
  %447 = vmatpush.msra.mxu0 0.0
  %448 = vmatpush.msra.mxu0 0.0
  %449 = vmatpush.msra.mxu0 0.0
  %450 = vmatpush.msra.mxu0 0.0
  %451 = vmatpush.msra.mxu0 0.0
  %452 = vmatpush.msra.mxu0 0.0
  %453 = vmatpush.msra.mxu0 0.0
  %454 = vmatpush.msra.mxu0 0.0
  %455 = vmatpush.msra.mxu0 0.0
  %456 = vmatpush.msra.mxu0 0.0
  %457 = vmatpush.msra.mxu0 0.0
  %458 = vmatpush.msra.mxu0 0.0
  %459 = vmatpush.msra.mxu0 0.0
  %460 = vmatpush.msra.mxu0 0.0
  %461 = vmatpush.msra.mxu0 0.0
  %v462 = vand.u32 %v240, 4294901760
  %463 = vmatpush.msra.mxu0 %v462
  %v464 = vand.u32 %v227, 4294901760
  %465 = vmatmul.f32.gmra.mxu0 %v464
  %v466 = vpop.f32.mrf.mxu0
  %v467 = vadd.f32 %v433, %v466
  %v468 = vand.u32 %v230, 4294901760
  %469 = vmatmul.f32.gmra.mxu0 %v468
  %v470 = vpop.f32.mrf.mxu0
  %v471 = vadd.f32 %v437, %v470
  %v472 = vand.u32 %v233, 4294901760
  %473 = vmatmul.f32.gmra.mxu0 %v472
  %v474 = vpop.f32.mrf.mxu0
  %v475 = vadd.f32 %v441, %v474
  %v476 = vand.u32 %v236, 4294901760
  %477 = vmatmul.f32.gmra.mxu0 %v476
  %v478 = vpop.f32.mrf.mxu0
  %v479 = vadd.f32 %v445, %v478
  %480 = vdwg.mxu0
  %v481 = vmax.f32 %v467, 0.0
  %v482 = vmax.f32 %v471, 0.0
  %v483 = vmax.f32 %v475, 0.0
  %v484 = vmax.f32 %v479, 0.0
  %v485 = vld [vmem:[%s5] sm:$0xf]
  %v486 = vld [vmem:[%s6] sm:$0xf]
  %488 = vset.pattern.permute.xlu0 0
  %489 = vperm.xlu0 %488, %v486
  %v490 = vpop.permute.xlu0 %489
  %vm492 = vcmask 261120
  %v494 = vsel %vm492, %v485, 0
  %496 = vmatpush.msra.mxu0 0.0
  %497 = vmatpush.msra.mxu0 0.0
  %498 = vmatpush.msra.mxu0 0.0
  %499 = vmatpush.msra.mxu0 0.0
  %500 = vmatpush.msra.mxu0 0.0
  %501 = vmatpush.msra.mxu0 0.0
  %502 = vmatpush.msra.mxu0 0.0
  %503 = vmatpush.msra.mxu0 0.0
  %504 = vmatpush.msra.mxu0 0.0
  %505 = vmatpush.msra.mxu0 0.0
  %506 = vmatpush.msra.mxu0 0.0
  %507 = vmatpush.msra.mxu0 0.0
  %v508 = vand.u32 %v484, 4294901760
  %509 = vmatpush.msra.mxu0 %v508
  %v510 = vand.u32 %v483, 4294901760
  %511 = vmatpush.msra.mxu0 %v510
  %v512 = vand.u32 %v482, 4294901760
  %513 = vmatpush.msra.mxu0 %v512
  %v514 = vand.u32 %v481, 4294901760
  %515 = vmatpush.msra.mxu0 %v514
  %v516 = vand.u32 %v494, 4294901760
  %v517 = vsub.f32 %v494, %v516
  %v518 = vand.u32 %v517, 4294901760
  %v519 = vsub.f32 %v517, %v518
  %v520 = vand.u32 %v519, 4294901760
  %521 = vmatmul.f32.gmra.mxu0 %v520
  %v522 = vpop.f32.mrf.mxu0
  %v523 = vadd.f32 %v490, %v522
  %524 = vdwg.mxu0
  %525 = vmatpush.msra.mxu0 0.0
  %526 = vmatpush.msra.mxu0 0.0
  %527 = vmatpush.msra.mxu0 0.0
  %528 = vmatpush.msra.mxu0 0.0
  %529 = vmatpush.msra.mxu0 0.0
  %530 = vmatpush.msra.mxu0 0.0
  %531 = vmatpush.msra.mxu0 0.0
  %532 = vmatpush.msra.mxu0 0.0
  %533 = vmatpush.msra.mxu0 0.0
  %534 = vmatpush.msra.mxu0 0.0
  %535 = vmatpush.msra.mxu0 0.0
  %536 = vmatpush.msra.mxu0 0.0
  %v537 = vand.u32 %v484, 4294901760
  %v538 = vsub.f32 %v484, %v537
  %v539 = vand.u32 %v538, 4294901760
  %v540 = vsub.f32 %v538, %v539
  %v541 = vand.u32 %v540, 4294901760
  %542 = vmatpush.msra.mxu0 %v541
  %v543 = vand.u32 %v483, 4294901760
  %v544 = vsub.f32 %v483, %v543
  %v545 = vand.u32 %v544, 4294901760
  %v546 = vsub.f32 %v544, %v545
  %v547 = vand.u32 %v546, 4294901760
  %548 = vmatpush.msra.mxu0 %v547
  %v549 = vand.u32 %v482, 4294901760
  %v550 = vsub.f32 %v482, %v549
  %v551 = vand.u32 %v550, 4294901760
  %v552 = vsub.f32 %v550, %v551
  %v553 = vand.u32 %v552, 4294901760
  %554 = vmatpush.msra.mxu0 %v553
  %v555 = vand.u32 %v481, 4294901760
  %v556 = vsub.f32 %v481, %v555
  %v557 = vand.u32 %v556, 4294901760
  %v558 = vsub.f32 %v556, %v557
  %v559 = vand.u32 %v558, 4294901760
  %560 = vmatpush.msra.mxu0 %v559
  %v561 = vand.u32 %v494, 4294901760
  %562 = vmatmul.f32.gmra.mxu0 %v561
  %v563 = vpop.f32.mrf.mxu0
  %v564 = vadd.f32 %v523, %v563
  %565 = vdwg.mxu0
  %566 = vmatpush.msra.mxu0 0.0
  %567 = vmatpush.msra.mxu0 0.0
  %568 = vmatpush.msra.mxu0 0.0
  %569 = vmatpush.msra.mxu0 0.0
  %570 = vmatpush.msra.mxu0 0.0
  %571 = vmatpush.msra.mxu0 0.0
  %572 = vmatpush.msra.mxu0 0.0
  %573 = vmatpush.msra.mxu0 0.0
  %574 = vmatpush.msra.mxu0 0.0
  %575 = vmatpush.msra.mxu0 0.0
  %576 = vmatpush.msra.mxu0 0.0
  %577 = vmatpush.msra.mxu0 0.0
  %v578 = vand.u32 %v484, 4294901760
  %v579 = vsub.f32 %v484, %v578
  %580 = vmatpush.msra.mxu0 %v579
  %v581 = vand.u32 %v483, 4294901760
  %v582 = vsub.f32 %v483, %v581
  %583 = vmatpush.msra.mxu0 %v582
  %v584 = vand.u32 %v482, 4294901760
  %v585 = vsub.f32 %v482, %v584
  %586 = vmatpush.msra.mxu0 %v585
  %v587 = vand.u32 %v481, 4294901760
  %v588 = vsub.f32 %v481, %v587
  %589 = vmatpush.msra.mxu0 %v588
  %v590 = vand.u32 %v494, 4294901760
  %v591 = vsub.f32 %v494, %v590
  %592 = vmatmul.f32.gmra.mxu0 %v591
  %v593 = vpop.f32.mrf.mxu0
  %v594 = vadd.f32 %v564, %v593
  %595 = vdwg.mxu0
  %596 = vmatpush.msra.mxu0 0.0
  %597 = vmatpush.msra.mxu0 0.0
  %598 = vmatpush.msra.mxu0 0.0
  %599 = vmatpush.msra.mxu0 0.0
  %600 = vmatpush.msra.mxu0 0.0
  %601 = vmatpush.msra.mxu0 0.0
  %602 = vmatpush.msra.mxu0 0.0
  %603 = vmatpush.msra.mxu0 0.0
  %604 = vmatpush.msra.mxu0 0.0
  %605 = vmatpush.msra.mxu0 0.0
  %606 = vmatpush.msra.mxu0 0.0
  %607 = vmatpush.msra.mxu0 0.0
  %v608 = vand.u32 %v484, 4294901760
  %609 = vmatpush.msra.mxu0 %v608
  %v610 = vand.u32 %v483, 4294901760
  %611 = vmatpush.msra.mxu0 %v610
  %v612 = vand.u32 %v482, 4294901760
  %613 = vmatpush.msra.mxu0 %v612
  %v614 = vand.u32 %v481, 4294901760
  %615 = vmatpush.msra.mxu0 %v614
  %v616 = vand.u32 %v494, 4294901760
  %v617 = vsub.f32 %v494, %v616
  %v618 = vand.u32 %v617, 4294901760
  %619 = vmatmul.f32.gmra.mxu0 %v618
  %v620 = vpop.f32.mrf.mxu0
  %v621 = vadd.f32 %v594, %v620
  %622 = vdwg.mxu0
  %623 = vmatpush.msra.mxu0 0.0
  %624 = vmatpush.msra.mxu0 0.0
  %625 = vmatpush.msra.mxu0 0.0
  %626 = vmatpush.msra.mxu0 0.0
  %627 = vmatpush.msra.mxu0 0.0
  %628 = vmatpush.msra.mxu0 0.0
  %629 = vmatpush.msra.mxu0 0.0
  %630 = vmatpush.msra.mxu0 0.0
  %631 = vmatpush.msra.mxu0 0.0
  %632 = vmatpush.msra.mxu0 0.0
  %633 = vmatpush.msra.mxu0 0.0
  %634 = vmatpush.msra.mxu0 0.0
  %v635 = vand.u32 %v484, 4294901760
  %v636 = vsub.f32 %v484, %v635
  %v637 = vand.u32 %v636, 4294901760
  %638 = vmatpush.msra.mxu0 %v637
  %v639 = vand.u32 %v483, 4294901760
  %v640 = vsub.f32 %v483, %v639
  %v641 = vand.u32 %v640, 4294901760
  %642 = vmatpush.msra.mxu0 %v641
  %v643 = vand.u32 %v482, 4294901760
  %v644 = vsub.f32 %v482, %v643
  %v645 = vand.u32 %v644, 4294901760
  %646 = vmatpush.msra.mxu0 %v645
  %v647 = vand.u32 %v481, 4294901760
  %v648 = vsub.f32 %v481, %v647
  %v649 = vand.u32 %v648, 4294901760
  %650 = vmatpush.msra.mxu0 %v649
  %v651 = vand.u32 %v494, 4294901760
  %652 = vmatmul.f32.gmra.mxu0 %v651
  %v653 = vpop.f32.mrf.mxu0
  %v654 = vadd.f32 %v621, %v653
  %655 = vdwg.mxu0
  %656 = vmatpush.msra.mxu0 0.0
  %657 = vmatpush.msra.mxu0 0.0
  %658 = vmatpush.msra.mxu0 0.0
  %659 = vmatpush.msra.mxu0 0.0
  %660 = vmatpush.msra.mxu0 0.0
  %661 = vmatpush.msra.mxu0 0.0
  %662 = vmatpush.msra.mxu0 0.0
  %663 = vmatpush.msra.mxu0 0.0
  %664 = vmatpush.msra.mxu0 0.0
  %665 = vmatpush.msra.mxu0 0.0
  %666 = vmatpush.msra.mxu0 0.0
  %667 = vmatpush.msra.mxu0 0.0
  %v668 = vand.u32 %v484, 4294901760
  %669 = vmatpush.msra.mxu0 %v668
  %v670 = vand.u32 %v483, 4294901760
  %671 = vmatpush.msra.mxu0 %v670
  %v672 = vand.u32 %v482, 4294901760
  %673 = vmatpush.msra.mxu0 %v672
  %v674 = vand.u32 %v481, 4294901760
  %675 = vmatpush.msra.mxu0 %v674
  %v676 = vand.u32 %v494, 4294901760
  %677 = vmatmul.f32.gmra.mxu0 %v676
  %v678 = vpop.f32.mrf.mxu0
  %v679 = vadd.f32 %v654, %v678
  %680 = vdwg.mxu0
  %681 = vst.msk [vmem:[%s7] sm:$0xf] %vm195, %v679
  // Predicated region
  $region30: #{decoder_forward.1} parent=0 // pred_check
    _
  $region31: #{decoder_forward.1} parent=0 // pred_check_branch
    %683 = sbr.rel (0) target = $region33
  $region32: #{decoder_forward.1} parent=0 // pred_region
    _
  $region33: #{decoder_forward.1} parent=0 // pred_fallthru
    _
  // Predicated region
  $region34: #{decoder_forward.1} parent=0 // pred_check
    _
  $region35: #{decoder_forward.1} parent=0 // pred_check_branch
    %685 = sbr.rel (0) target = $region37
  $region36: #{decoder_forward.1} parent=0 // pred_region
    _
  $region37: #{decoder_forward.1} parent=0 // pred_fallthru
    _
  // Predicated region
  $region38: #{decoder_forward.1} parent=0 // pred_check
    _
  $region39: #{decoder_forward.1} parent=0 // pred_check_branch
    %687 = sbr.rel (0) target = $region41
  $region40: #{decoder_forward.1} parent=0 // pred_region
    _
  $region41: #{decoder_forward.1} parent=0 // pred_fallthru
    _
  // Predicated region
  $region42: #{decoder_forward.1} parent=0 // pred_check
    _
  $region43: #{decoder_forward.1} parent=0 // pred_check_branch
    %689 = sbr.rel (0) target = $region45
  $region44: #{decoder_forward.1} parent=0 // pred_region
    _
  $region45: #{decoder_forward.1} parent=0 // pred_fallthru
    _

</llo_original>
